<compile_context>
chip_gen: v7x
topology: tpu7x:2x2x1
jax: 0.10.0
libtpu: 0.0.40
codegen_flags: <defaults>
</compile_context>

<pallas_src>
import functools
import math

import jax
import jax.numpy as jnp
from jax.experimental import pallas as pl
from jax.experimental.pallas import tpu as pltpu


def _round_up(x, m):
    return ((x + m - 1) // m) * m


def _lane_shift(x, d, size):
    """result[:, p] = x[:, (p + d) % size] for a static shift d.

    Lowered to two static lane slices + a concat (XLU rotates); for interior
    pixels the 3x3 receptive field never wraps, and wrapped garbage at
    non-interior lanes is killed by the validity mask downstream.
    """
    dd = d % size
    if dd == 0:
        return x
    return jnp.concatenate([x[:, dd:], x[:, :dd]], axis=1)


def _make_conv_bn_kernel(taps, lane, mxu_dtype, pre_affine):
    """conv3x3 as ONE stacked-K MXU matmul + single-sweep BN sum/sumsq.

    pre_affine=False : pass A  (x            -> a1, bn1 stats)
    pre_affine=True  : pass B  (relu(bn1(a1)) -> a2, bn2 stats)
    """

    def kernel(*refs):
        if pre_affine:
            x_ref, w_ref, cpar_ref, mask_ref, out_ref, stats_ref = refs
        else:
            x_ref, w_ref, mask_ref, out_ref, stats_ref = refs

        @pl.when(pl.program_id(0) == 0)
        def _init():
            stats_ref[...] = jnp.zeros_like(stats_ref)

        mask = mask_ref[...]                         # (1, LANE), 1.0 on valid pixels
        x = x_ref[0].astype(jnp.float32)             # (c8, LANE)
        if pre_affine:
            scale = cpar_ref[:, 0:1]                 # (c8, 1) folded BN scale
            bias = cpar_ref[:, 1:2]                  # (c8, 1) folded BN bias
            # BN affine + ReLU in f32 on the VPU; the mask both re-creates the
            # conv2 zero-padding ring and kills garbage lanes outside the image.
            x = mask * jnp.maximum(x * scale + bias, 0.0)

        # Stack the 9 lane-shifted taps along the contraction axis -> a single
        # (c8, 9*c8) x (9*c8, LANE) MXU matmul (K = 72 here; K = 9*C at real
        # channel counts, which is what fills the 128/256-wide systolic array).
        xs = jnp.concatenate([_lane_shift(x, d, lane) for d in taps], axis=0)
        acc = jnp.dot(w_ref[...], xs.astype(mxu_dtype),
                      preferred_element_type=jnp.float32)       # (c8, LANE) f32

        out_ref[0] = acc.astype(out_ref.dtype)

        # BN batch statistics over valid pixels only, fused into one sweep:
        # accumulate sum and sum-of-squares; mean/var folded in the wrapper.
        masked = acc * mask
        s = jnp.sum(masked, axis=1, keepdims=True)
        ss = jnp.sum(masked * acc, axis=1, keepdims=True)
        stats_ref[...] += jnp.concatenate([s, ss], axis=1)       # (c8, 2)

    return kernel


def _finalize_kernel(a2_ref, x_ref, cpar_ref, mask_ref, out_ref):
    """bn2 affine + residual + relu.  Pure element-wise -> 'parallel' grid axis."""
    a2 = a2_ref[0].astype(jnp.float32)
    scale = cpar_ref[:, 0:1]
    bias = cpar_ref[:, 1:2]
    # x_ref is zero on the padding ring / dead lanes, so out is 0 there too.
    out_ref[0] = jnp.maximum(mask_ref[...] * (a2 * scale + bias) + x_ref[0], 0.0)


@functools.partial(jax.jit, static_argnames=("mxu_dtype",))
def basic_block_forward(x_nchw, w1, g1, b1, w2, g2, b2, *,
                        mxu_dtype=jnp.float32):
    """BasicBlock.forward.  x_nchw: (N, Cin, H, W) f32; conv weights in HWIO."""
    n, cin, h, w = x_nchw.shape
    cmid = w1.shape[-1]
    cout = w2.shape[-1]
    hp, wp = h + 2, w + 2
    p = hp * wp                                   # flat padded pixels per image
    lane = _round_up(p, 128)                      # lane-dense pixel axis
    c8 = 8 * int(math.ceil(max(cin, cmid, cout, 1) / 8))
    count = float(n * h * w)                      # BN averages valid pixels only
    taps = tuple((kh - 1) * wp + (kw - 1) for kh in range(3) for kw in range(3))
    inter_dtype = mxu_dtype                       # a1/a2 stored at MXU precision
    itemsize = jnp.dtype(inter_dtype).itemsize

    # ---------------- wrapper glue (no transposes; pads/reshapes only) --------
    # Input slab (N, c8, LANE): channels on sublanes, flat padded pixels on lanes.
    xp = jnp.pad(x_nchw.astype(jnp.float32),
                 ((0, 0), (0, c8 - cin), (1, 1), (1, 1)))        # (N, c8, Hp, Wp)
    x_slab = jnp.pad(xp.reshape(n, c8, p), ((0, 0), (0, 0), (0, lane - p)))

    # Stacked conv weights (c8, 9*c8): W[co, t*c8 + ci] = w[kh_t, kw_t, ci, co].
    def stack_w(wgt, ci_dim, co_dim):
        t = jnp.transpose(wgt.astype(jnp.float32), (3, 0, 1, 2))
        t = t.reshape(co_dim, 9, ci_dim)
        t = jnp.pad(t, ((0, c8 - co_dim), (0, 0), (0, c8 - ci_dim)))
        return t.reshape(c8, 9 * c8).astype(mxu_dtype)

    w1s = stack_w(w1, cin, cmid)
    w2s = stack_w(w2, cmid, cout)

    # Validity mask over the lane axis (1.0 on the HxW interior of each image).
    rr = jnp.arange(hp)
    cc = jnp.arange(wp)
    interior = (((rr >= 1) & (rr <= h))[:, None] &
                ((cc >= 1) & (cc <= w))[None, :]).reshape(1, p)
    mask = jnp.pad(interior.astype(jnp.float32), ((0, 0), (0, lane - p)))

    # Fold accumulated (sum, sumsq) into BN (scale, bias).  NOTE: dead (padded)
    # channels rely on gamma being ZERO-padded: their var is 0, rsqrt(eps) is
    # huge, but scale = 0 * rsqrt(eps) = 0 keeps garbage out of the output.
    def bn_affine(stats, gamma, beta, cdim):
        mean = stats[:, 0] / count
        var = jnp.maximum(stats[:, 1] / count - mean * mean, 0.0)
        g = jnp.pad(gamma.reshape(-1).astype(jnp.float32), (0, c8 - cdim))
        bt = jnp.pad(beta.reshape(-1).astype(jnp.float32), (0, c8 - cdim))
        scale = g * jax.lax.rsqrt(var + 1e-5)
        return jnp.stack([scale, bt - mean * scale], axis=1)     # (c8, 2) f32

    # ---------------- Pallas specs ---------------------------------------------
    def img_spec():
        return pl.BlockSpec((1, c8, lane), lambda b: (b, 0, 0))

    def const_spec(shape):
        return pl.BlockSpec(shape, lambda b: tuple(0 for _ in shape))

    reduce_params = pltpu.CompilerParams(
        dimension_semantics=("arbitrary",),        # BN stats accumulate over batch
        vmem_limit_bytes=32 * 1024 * 1024)
    parallel_params = pltpu.CompilerParams(
        dimension_semantics=("parallel",),         # v7x: split batch over 2 TCs
        vmem_limit_bytes=32 * 1024 * 1024)

    slab_elems = n * c8 * lane
    conv_flops = 2 * n * lane * c8 * 9 * c8

    # ---------------- pass A: conv1 + bn1 statistics ---------------------------
    a1, stats1 = pl.pallas_call(
        _make_conv_bn_kernel(taps, lane, mxu_dtype, pre_affine=False),
        grid=(n,),
        in_specs=[img_spec(), const_spec((c8, 9 * c8)), const_spec((1, lane))],
        out_specs=(img_spec(), const_spec((c8, 2))),
        out_shape=(jax.ShapeDtypeStruct((n, c8, lane), inter_dtype),
                   jax.ShapeDtypeStruct((c8, 2), jnp.float32)),
        compiler_params=reduce_params,
        cost_estimate=pl.CostEstimate(
            flops=conv_flops, transcendentals=0,
            bytes_accessed=int(slab_elems * 4 + slab_elems * itemsize
                               + w1s.size * itemsize + mask.size * 4 + c8 * 8)),
    )(x_slab, w1s, mask)

    cpar1 = bn_affine(stats1, g1, b1, cmid)

    # ---------------- pass B: bn1 + relu + conv2 + bn2 statistics --------------
    a2, stats2 = pl.pallas_call(
        _make_conv_bn_kernel(taps, lane, mxu_dtype, pre_affine=True),
        grid=(n,),
        in_specs=[img_spec(), const_spec((c8, 9 * c8)), const_spec((c8, 2)),
                  const_spec((1, lane))],
        out_specs=(img_spec(), const_spec((c8, 2))),
        out_shape=(jax.ShapeDtypeStruct((n, c8, lane), inter_dtype),
                   jax.ShapeDtypeStruct((c8, 2), jnp.float32)),
        compiler_params=reduce_params,
        cost_estimate=pl.CostEstimate(
            flops=conv_flops + 4 * slab_elems, transcendentals=0,
            bytes_accessed=int(2 * slab_elems * itemsize
                               + w2s.size * itemsize + mask.size * 4 + c8 * 16)),
    )(a1, w2s, cpar1, mask)

    cpar2 = bn_affine(stats2, g2, b2, cout)

    # ---------------- pass C: bn2 + residual + relu ----------------------------
    out_slab = pl.pallas_call(
        _finalize_kernel,
        grid=(n,),
        in_specs=[img_spec(), img_spec(), const_spec((c8, 2)),
                  const_spec((1, lane))],
        out_specs=img_spec(),
        out_shape=jax.ShapeDtypeStruct((n, c8, lane), jnp.float32),
        compiler_params=parallel_params,
        cost_estimate=pl.CostEstimate(
            flops=4 * slab_elems, transcendentals=0,
            bytes_accessed=int(slab_elems * itemsize + 2 * slab_elems * 4
                               + mask.size * 4 + c8 * 8)),
    )(a2, x_slab, cpar2, mask)

    # ---------------- glue out: keep real channels / interior pixels -----------
    return out_slab[:, :cout, :p].reshape(n, cout, hp, wp)[:, :, 1:h + 1, 1:w + 1]


def _reference_forward(x_nchw, w1, g1, b1, w2, g2, b2):
    """Pure-JAX f32 reference of the same forward pass (sanity check)."""
    def conv(x, wgt):
        return jax.lax.conv_general_dilated(
            x, wgt, window_strides=(1, 1), padding="SAME",
            dimension_numbers=("NHWC", "HWIO", "NHWC"))

    def bn(x, g, b):
        mean = jnp.mean(x, axis=(0, 1, 2), keepdims=True)
        var = jnp.mean((x - mean) ** 2, axis=(0, 1, 2), keepdims=True)
        return (x - mean) * (g.reshape(1, 1, 1, -1) / jnp.sqrt(var + 1e-5)) \
            + b.reshape(1, 1, 1, -1)

    x = jnp.transpose(x_nchw, (0, 2, 3, 1))
    out = jax.nn.relu(bn(conv(x, w1), g1, b1))
    out = bn(conv(out, w2), g2, b2) + x
    out = jax.nn.relu(out)
    return jnp.transpose(out, (0, 3, 1, 2))


if __name__ == "__main__":
    # BasicBlock(inplanes=4, planes=4, pruning_rate=0.5)
    inplanes, planes, pruning_rate = 4, 4, 0.5
    pruned = int(planes - math.floor(planes * pruning_rate))      # = 2
    N, H, W = 2, 16, 16

    key = jax.random.PRNGKey(0)
    kx, k1, k2 = jax.random.split(key, 3)

    x = jax.random.normal(kx, (N, inplanes, H, W), dtype=jnp.float32)

    # conv weights in HWIO; deterministic kaiming-like init.
    w1 = jax.random.normal(k1, (3, 3, inplanes, pruned), dtype=jnp.float32) \
        * (1.0 / math.sqrt(9 * inplanes))
    w2 = jax.random.normal(k2, (3, 3, pruned, planes), dtype=jnp.float32) \
        * (1.0 / math.sqrt(9 * pruned))

    # BatchNorm2d default init: gamma = 1, beta = 0.
    g1 = jnp.ones((pruned,), jnp.float32)
    b1 = jnp.zeros((pruned,), jnp.float32)
    g2 = jnp.ones((planes,), jnp.float32)
    b2 = jnp.zeros((planes,), jnp.float32)

    ref = jax.block_until_ready(_reference_forward(x, w1, g1, b1, w2, g2, b2))

    # f32 MXU path: strict check against the f32 reference.
    out_f32 = jax.block_until_ready(
        basic_block_forward(x, w1, g1, b1, w2, g2, b2, mxu_dtype=jnp.float32))
    assert out_f32.shape == (N, planes, H, W), out_f32.shape
    err_f32 = float(jnp.max(jnp.abs(out_f32 - ref)))
    assert err_f32 < 1e-4, err_f32

    # bf16 MXU-operand path (v6e/v7x recommendation): looser tolerance since the
    # reference stays f32 end-to-end.
    out_bf16 = jax.block_until_ready(
        basic_block_forward(x, w1, g1, b1, w2, g2, b2, mxu_dtype=jnp.bfloat16))
    err_bf16 = float(jnp.max(jnp.abs(out_bf16 - ref)))
    assert err_bf16 < 6e-2, err_bf16

    print("KERNEL_OK")
</pallas_src>

<mosaic_0001>
module attributes {stable_mosaic.version = 11 : i64} {
  func.func @kernel(%arg0: i32, %arg1: memref<1x8x384xf32, #tpu.memory_space<vmem>>, %arg2: memref<8x72xf32, #tpu.memory_space<vmem>>, %arg3: memref<1x384xf32, #tpu.memory_space<vmem>>, %arg4: memref<1x8x384xf32, #tpu.memory_space<vmem>>, %arg5: memref<8x2xf32, #tpu.memory_space<vmem>>) attributes {dimension_semantics = [#tpu.dimension_semantics<arbitrary>], iteration_bounds = array<i64: 2>, scalar_prefetch = 0 : i64, scratch_operands = 0 : i64, tpu.core_type = #tpu.core_type<tc>, window_params = [{transform_indices = @transform_0, window_bounds = array<i64: 1, 8, 384>}, {pipeline_mode = #tpu.pipeline_mode<synchronous>, transform_indices = @transform_1, window_bounds = array<i64: 8, 72>}, {pipeline_mode = #tpu.pipeline_mode<synchronous>, transform_indices = @transform_2, window_bounds = array<i64: 1, 384>}, {transform_indices = @transform_3, window_bounds = array<i64: 1, 8, 384>}, {pipeline_mode = #tpu.pipeline_mode<synchronous>, transform_indices = @transform_4, window_bounds = array<i64: 8, 2>}]} {
    %c0_i32 = arith.constant 0 : i32
    %0 = arith.cmpi eq, %arg0, %c0_i32 : i32
    %1 = arith.extui %0 : i1 to i32
    %c0_i32_0 = arith.constant 0 : i32
    %2 = arith.cmpi ne, %1, %c0_i32_0 : i32
    scf.if %2 {
      %cst_16 = arith.constant 0.000000e+00 : f32
      %47 = vector.broadcast %cst_16 : f32 to vector<8x2xf32>
      %c0_17 = arith.constant 0 : index
      %c0_18 = arith.constant 0 : index
      %48 = vector.load %arg5[%c0_17, %c0_18] : memref<8x2xf32, #tpu.memory_space<vmem>>, vector<8x2xf32>
      tpu.vector_store %arg5[%c0_17, %c0_18], %47 {strides = array<i32>} : memref<8x2xf32, #tpu.memory_space<vmem>>, vector<8x2xf32>,
    } else {
    }
    %c0 = arith.constant 0 : index
    %c0_1 = arith.constant 0 : index
    %3 = vector.load %arg3[%c0, %c0_1] : memref<1x384xf32, #tpu.memory_space<vmem>>, vector<1x384xf32>
    %c0_2 = arith.constant 0 : index
    %c0_3 = arith.constant 0 : index
    %c0_4 = arith.constant 0 : index
    %4 = vector.load %arg1[%c0_2, %c0_3, %c0_4] : memref<1x8x384xf32, #tpu.memory_space<vmem>>, vector<1x8x384xf32>
    %5 = vector.shape_cast %4 : vector<1x8x384xf32> to vector<8x384xf32>
    %6 = vector.extract_strided_slice %5 {offsets = [0, 365], sizes = [8, 19], strides = [1, 1]} : vector<8x384xf32> to vector<8x19xf32>
    %7 = vector.extract_strided_slice %5 {offsets = [0, 0], sizes = [8, 365], strides = [1, 1]} : vector<8x384xf32> to vector<8x365xf32>
    %8 = tpu.concatenate %6, %7 in 1 : vector<8x19xf32>, vector<8x365xf32> -> vector<8x384xf32>
    %9 = vector.extract_strided_slice %5 {offsets = [0, 366], sizes = [8, 18], strides = [1, 1]} : vector<8x384xf32> to vector<8x18xf32>
    %10 = vector.extract_strided_slice %5 {offsets = [0, 0], sizes = [8, 366], strides = [1, 1]} : vector<8x384xf32> to vector<8x366xf32>
    %11 = tpu.concatenate %9, %10 in 1 : vector<8x18xf32>, vector<8x366xf32> -> vector<8x384xf32>
    %12 = vector.extract_strided_slice %5 {offsets = [0, 367], sizes = [8, 17], strides = [1, 1]} : vector<8x384xf32> to vector<8x17xf32>
    %13 = vector.extract_strided_slice %5 {offsets = [0, 0], sizes = [8, 367], strides = [1, 1]} : vector<8x384xf32> to vector<8x367xf32>
    %14 = tpu.concatenate %12, %13 in 1 : vector<8x17xf32>, vector<8x367xf32> -> vector<8x384xf32>
    %15 = vector.extract_strided_slice %5 {offsets = [0, 383], sizes = [8, 1], strides = [1, 1]} : vector<8x384xf32> to vector<8x1xf32>
    %16 = vector.extract_strided_slice %5 {offsets = [0, 0], sizes = [8, 383], strides = [1, 1]} : vector<8x384xf32> to vector<8x383xf32>
    %17 = tpu.concatenate %15, %16 in 1 : vector<8x1xf32>, vector<8x383xf32> -> vector<8x384xf32>
    %18 = vector.extract_strided_slice %5 {offsets = [0, 1], sizes = [8, 383], strides = [1, 1]} : vector<8x384xf32> to vector<8x383xf32>
    %19 = vector.extract_strided_slice %5 {offsets = [0, 0], sizes = [8, 1], strides = [1, 1]} : vector<8x384xf32> to vector<8x1xf32>
    %20 = tpu.concatenate %18, %19 in 1 : vector<8x383xf32>, vector<8x1xf32> -> vector<8x384xf32>
    %21 = vector.extract_strided_slice %5 {offsets = [0, 17], sizes = [8, 367], strides = [1, 1]} : vector<8x384xf32> to vector<8x367xf32>
    %22 = vector.extract_strided_slice %5 {offsets = [0, 0], sizes = [8, 17], strides = [1, 1]} : vector<8x384xf32> to vector<8x17xf32>
    %23 = tpu.concatenate %21, %22 in 1 : vector<8x367xf32>, vector<8x17xf32> -> vector<8x384xf32>
    %24 = vector.extract_strided_slice %5 {offsets = [0, 18], sizes = [8, 366], strides = [1, 1]} : vector<8x384xf32> to vector<8x366xf32>
    %25 = vector.extract_strided_slice %5 {offsets = [0, 0], sizes = [8, 18], strides = [1, 1]} : vector<8x384xf32> to vector<8x18xf32>
    %26 = tpu.concatenate %24, %25 in 1 : vector<8x366xf32>, vector<8x18xf32> -> vector<8x384xf32>
    %27 = vector.extract_strided_slice %5 {offsets = [0, 19], sizes = [8, 365], strides = [1, 1]} : vector<8x384xf32> to vector<8x365xf32>
    %28 = vector.extract_strided_slice %5 {offsets = [0, 0], sizes = [8, 19], strides = [1, 1]} : vector<8x384xf32> to vector<8x19xf32>
    %29 = tpu.concatenate %27, %28 in 1 : vector<8x365xf32>, vector<8x19xf32> -> vector<8x384xf32>
    %30 = tpu.concatenate %8, %11, %14, %17, %5, %20, %23, %26, %29 in 0 : vector<8x384xf32>, vector<8x384xf32>, vector<8x384xf32>, vector<8x384xf32>, vector<8x384xf32>, vector<8x384xf32>, vector<8x384xf32>, vector<8x384xf32>, vector<8x384xf32> -> vector<72x384xf32>
    %c0_5 = arith.constant 0 : index
    %c0_6 = arith.constant 0 : index
    %31 = vector.load %arg2[%c0_5, %c0_6] : memref<8x72xf32, #tpu.memory_space<vmem>>, vector<8x72xf32>
    %cst = arith.constant dense<0.000000e+00> : vector<8x384xf32>
    %32 = tpu.matmul %31, %30, %cst {dimension_numbers = #tpu.dot_dimension_numbers<[1], [0], [0], [1], [0, 0, 1, 1], [], []>} : vector<8x72xf32>, vector<72x384xf32>, vector<8x384xf32> -> vector<8x384xf32>
    %c0_7 = arith.constant 0 : index
    %c0_8 = arith.constant 0 : index
    %c0_9 = arith.constant 0 : index
    %33 = vector.load %arg4[%c0_7, %c0_8, %c0_9] : memref<1x8x384xf32, #tpu.memory_space<vmem>>, vector<1x8x384xf32>
    %34 = vector.shape_cast %33 : vector<1x8x384xf32> to vector<8x384xf32>
    %35 = vector.shape_cast %32 : vector<8x384xf32> to vector<1x8x384xf32>
    tpu.vector_store %arg4[%c0_7, %c0_8, %c0_9], %35 {strides = array<i32>} : memref<1x8x384xf32, #tpu.memory_space<vmem>>, vector<1x8x384xf32>,
    %36 = vector.broadcast %3 : vector<1x384xf32> to vector<8x384xf32>
    %37 = arith.mulf %32, %36 : vector<8x384xf32>
    %cst_10 = arith.constant dense<0.000000e+00> : vector<8xf32>
    %38 = vector.multi_reduction <add>, %37, %cst_10 [1] : vector<8x384xf32> to vector<8xf32>
    %39 = vector.shape_cast %38 : vector<8xf32> to vector<8x1xf32>
    %40 = arith.mulf %37, %32 : vector<8x384xf32>
    %cst_11 = arith.constant dense<0.000000e+00> : vector<8xf32>
    %41 = vector.multi_reduction <add>, %40, %cst_11 [1] : vector<8x384xf32> to vector<8xf32>
    %42 = vector.shape_cast %41 : vector<8xf32> to vector<8x1xf32>
    %c0_12 = arith.constant 0 : index
    %c0_13 = arith.constant 0 : index
    %43 = vector.load %arg5[%c0_12, %c0_13] : memref<8x2xf32, #tpu.memory_space<vmem>>, vector<8x2xf32>
    %44 = tpu.concatenate %39, %42 in 1 : vector<8x1xf32>, vector<8x1xf32> -> vector<8x2xf32>
    %45 = arith.addf %43, %44 : vector<8x2xf32>
    %c0_14 = arith.constant 0 : index
    %c0_15 = arith.constant 0 : index
    %46 = vector.load %arg5[%c0_14, %c0_15] : memref<8x2xf32, #tpu.memory_space<vmem>>, vector<8x2xf32>
    tpu.vector_store %arg5[%c0_14, %c0_15], %45 {strides = array<i32>} : memref<8x2xf32, #tpu.memory_space<vmem>>, vector<8x2xf32>,
    return
  }
  func.func @transform_0(%arg0: i32) -> (i32, i32, i32) {
    %c0_i32 = arith.constant 0 : i32
    %c0_i32_0 = arith.constant 0 : i32
    %c0_i32_1 = arith.constant 0 : i32
    return %arg0, %c0_i32, %c0_i32_0 : i32, i32, i32
  }
  func.func @transform_1(%arg0: i32) -> (i32, i32) {
    %c0_i32 = arith.constant 0 : i32
    %c0_i32_0 = arith.constant 0 : i32
    %c0_i32_1 = arith.constant 0 : i32
    return %c0_i32, %c0_i32_0 : i32, i32
  }
  func.func @transform_2(%arg0: i32) -> (i32, i32) {
    %c0_i32 = arith.constant 0 : i32
    %c0_i32_0 = arith.constant 0 : i32
    %c0_i32_1 = arith.constant 0 : i32
    return %c0_i32, %c0_i32_0 : i32, i32
  }
  func.func @transform_3(%arg0: i32) -> (i32, i32, i32) {
    %c0_i32 = arith.constant 0 : i32
    %c0_i32_0 = arith.constant 0 : i32
    %c0_i32_1 = arith.constant 0 : i32
    return %arg0, %c0_i32, %c0_i32_0 : i32, i32, i32
  }
  func.func @transform_4(%arg0: i32) -> (i32, i32) {
    %c0_i32 = arith.constant 0 : i32
    %c0_i32_0 = arith.constant 0 : i32
    %c0_i32_1 = arith.constant 0 : i32
    return %c0_i32, %c0_i32_0 : i32, i32
  }
}

module attributes {stable_mosaic.version = 11 : i64} {
  func.func @kernel(%arg0: i32, %arg1: memref<1x8x384xf32, #tpu.memory_space<vmem>>, %arg2: memref<8x72xf32, #tpu.memory_space<vmem>>, %arg3: memref<8x2xf32, #tpu.memory_space<vmem>>, %arg4: memref<1x384xf32, #tpu.memory_space<vmem>>, %arg5: memref<1x8x384xf32, #tpu.memory_space<vmem>>, %arg6: memref<8x2xf32, #tpu.memory_space<vmem>>) attributes {dimension_semantics = [#tpu.dimension_semantics<arbitrary>], iteration_bounds = array<i64: 2>, scalar_prefetch = 0 : i64, scratch_operands = 0 : i64, tpu.core_type = #tpu.core_type<tc>, window_params = [{transform_indices = @transform_0, window_bounds = array<i64: 1, 8, 384>}, {pipeline_mode = #tpu.pipeline_mode<synchronous>, transform_indices = @transform_1, window_bounds = array<i64: 8, 72>}, {pipeline_mode = #tpu.pipeline_mode<synchronous>, transform_indices = @transform_2, window_bounds = array<i64: 8, 2>}, {pipeline_mode = #tpu.pipeline_mode<synchronous>, transform_indices = @transform_3, window_bounds = array<i64: 1, 384>}, {transform_indices = @transform_4, window_bounds = array<i64: 1, 8, 384>}, {pipeline_mode = #tpu.pipeline_mode<synchronous>, transform_indices = @transform_5, window_bounds = array<i64: 8, 2>}]} {
    %c0_i32 = arith.constant 0 : i32
    %0 = arith.cmpi eq, %arg0, %c0_i32 : i32
    %1 = arith.extui %0 : i1 to i32
    %c0_i32_0 = arith.constant 0 : i32
    %2 = arith.cmpi ne, %1, %c0_i32_0 : i32
    scf.if %2 {
      %cst_20 = arith.constant 0.000000e+00 : f32
      %57 = vector.broadcast %cst_20 : f32 to vector<8x2xf32>
      %c0_21 = arith.constant 0 : index
      %c0_22 = arith.constant 0 : index
      %58 = vector.load %arg6[%c0_21, %c0_22] : memref<8x2xf32, #tpu.memory_space<vmem>>, vector<8x2xf32>
      tpu.vector_store %arg6[%c0_21, %c0_22], %57 {strides = array<i32>} : memref<8x2xf32, #tpu.memory_space<vmem>>, vector<8x2xf32>,
    } else {
    }
    %c0 = arith.constant 0 : index
    %c0_1 = arith.constant 0 : index
    %3 = vector.load %arg4[%c0, %c0_1] : memref<1x384xf32, #tpu.memory_space<vmem>>, vector<1x384xf32>
    %c0_2 = arith.constant 0 : index
    %c0_3 = arith.constant 0 : index
    %c0_4 = arith.constant 0 : index
    %4 = vector.load %arg1[%c0_2, %c0_3, %c0_4] : memref<1x8x384xf32, #tpu.memory_space<vmem>>, vector<1x8x384xf32>
    %5 = vector.shape_cast %4 : vector<1x8x384xf32> to vector<8x384xf32>
    %c0_5 = arith.constant 0 : index
    %c0_6 = arith.constant 0 : index
    %6 = vector.load %arg3[%c0_5, %c0_6] : memref<8x2xf32, #tpu.memory_space<vmem>>, vector<8x1xf32>
    %c0_7 = arith.constant 0 : index
    %c1 = arith.constant 1 : index
    %7 = vector.load %arg3[%c0_7, %c1] : memref<8x2xf32, #tpu.memory_space<vmem>>, vector<8x1xf32>
    %8 = vector.broadcast %6 : vector<8x1xf32> to vector<8x384xf32>
    %9 = arith.mulf %5, %8 : vector<8x384xf32>
    %10 = vector.broadcast %7 : vector<8x1xf32> to vector<8x384xf32>
    %11 = arith.addf %9, %10 : vector<8x384xf32>
    %cst = arith.constant 0.000000e+00 : f32
    %12 = vector.broadcast %cst : f32 to vector<8x384xf32>
    %13 = arith.maximumf %11, %12 : vector<8x384xf32>
    %14 = vector.broadcast %3 : vector<1x384xf32> to vector<8x384xf32>
    %15 = arith.mulf %14, %13 : vector<8x384xf32>
    %16 = vector.extract_strided_slice %15 {offsets = [0, 365], sizes = [8, 19], strides = [1, 1]} : vector<8x384xf32> to vector<8x19xf32>
    %17 = vector.extract_strided_slice %15 {offsets = [0, 0], sizes = [8, 365], strides = [1, 1]} : vector<8x384xf32> to vector<8x365xf32>
    %18 = tpu.concatenate %16, %17 in 1 : vector<8x19xf32>, vector<8x365xf32> -> vector<8x384xf32>
    %19 = vector.extract_strided_slice %15 {offsets = [0, 366], sizes = [8, 18], strides = [1, 1]} : vector<8x384xf32> to vector<8x18xf32>
    %20 = vector.extract_strided_slice %15 {offsets = [0, 0], sizes = [8, 366], strides = [1, 1]} : vector<8x384xf32> to vector<8x366xf32>
    %21 = tpu.concatenate %19, %20 in 1 : vector<8x18xf32>, vector<8x366xf32> -> vector<8x384xf32>
    %22 = vector.extract_strided_slice %15 {offsets = [0, 367], sizes = [8, 17], strides = [1, 1]} : vector<8x384xf32> to vector<8x17xf32>
    %23 = vector.extract_strided_slice %15 {offsets = [0, 0], sizes = [8, 367], strides = [1, 1]} : vector<8x384xf32> to vector<8x367xf32>
    %24 = tpu.concatenate %22, %23 in 1 : vector<8x17xf32>, vector<8x367xf32> -> vector<8x384xf32>
    %25 = vector.extract_strided_slice %15 {offsets = [0, 383], sizes = [8, 1], strides = [1, 1]} : vector<8x384xf32> to vector<8x1xf32>
    %26 = vector.extract_strided_slice %15 {offsets = [0, 0], sizes = [8, 383], strides = [1, 1]} : vector<8x384xf32> to vector<8x383xf32>
    %27 = tpu.concatenate %25, %26 in 1 : vector<8x1xf32>, vector<8x383xf32> -> vector<8x384xf32>
    %28 = vector.extract_strided_slice %15 {offsets = [0, 1], sizes = [8, 383], strides = [1, 1]} : vector<8x384xf32> to vector<8x383xf32>
    %29 = vector.extract_strided_slice %15 {offsets = [0, 0], sizes = [8, 1], strides = [1, 1]} : vector<8x384xf32> to vector<8x1xf32>
    %30 = tpu.concatenate %28, %29 in 1 : vector<8x383xf32>, vector<8x1xf32> -> vector<8x384xf32>
    %31 = vector.extract_strided_slice %15 {offsets = [0, 17], sizes = [8, 367], strides = [1, 1]} : vector<8x384xf32> to vector<8x367xf32>
    %32 = vector.extract_strided_slice %15 {offsets = [0, 0], sizes = [8, 17], strides = [1, 1]} : vector<8x384xf32> to vector<8x17xf32>
    %33 = tpu.concatenate %31, %32 in 1 : vector<8x367xf32>, vector<8x17xf32> -> vector<8x384xf32>
    %34 = vector.extract_strided_slice %15 {offsets = [0, 18], sizes = [8, 366], strides = [1, 1]} : vector<8x384xf32> to vector<8x366xf32>
    %35 = vector.extract_strided_slice %15 {offsets = [0, 0], sizes = [8, 18], strides = [1, 1]} : vector<8x384xf32> to vector<8x18xf32>
    %36 = tpu.concatenate %34, %35 in 1 : vector<8x366xf32>, vector<8x18xf32> -> vector<8x384xf32>
    %37 = vector.extract_strided_slice %15 {offsets = [0, 19], sizes = [8, 365], strides = [1, 1]} : vector<8x384xf32> to vector<8x365xf32>
    %38 = vector.extract_strided_slice %15 {offsets = [0, 0], sizes = [8, 19], strides = [1, 1]} : vector<8x384xf32> to vector<8x19xf32>
    %39 = tpu.concatenate %37, %38 in 1 : vector<8x365xf32>, vector<8x19xf32> -> vector<8x384xf32>
    %40 = tpu.concatenate %18, %21, %24, %27, %15, %30, %33, %36, %39 in 0 : vector<8x384xf32>, vector<8x384xf32>, vector<8x384xf32>, vector<8x384xf32>, vector<8x384xf32>, vector<8x384xf32>, vector<8x384xf32>, vector<8x384xf32>, vector<8x384xf32> -> vector<72x384xf32>
    %c0_8 = arith.constant 0 : index
    %c0_9 = arith.constant 0 : index
    %41 = vector.load %arg2[%c0_8, %c0_9] : memref<8x72xf32, #tpu.memory_space<vmem>>, vector<8x72xf32>
    %cst_10 = arith.constant dense<0.000000e+00> : vector<8x384xf32>
    %42 = tpu.matmul %41, %40, %cst_10 {dimension_numbers = #tpu.dot_dimension_numbers<[1], [0], [0], [1], [0, 0, 1, 1], [], []>} : vector<8x72xf32>, vector<72x384xf32>, vector<8x384xf32> -> vector<8x384xf32>
    %c0_11 = arith.constant 0 : index
    %c0_12 = arith.constant 0 : index
    %c0_13 = arith.constant 0 : index
    %43 = vector.load %arg5[%c0_11, %c0_12, %c0_13] : memref<1x8x384xf32, #tpu.memory_space<vmem>>, vector<1x8x384xf32>
    %44 = vector.shape_cast %43 : vector<1x8x384xf32> to vector<8x384xf32>
    %45 = vector.shape_cast %42 : vector<8x384xf32> to vector<1x8x384xf32>
    tpu.vector_store %arg5[%c0_11, %c0_12, %c0_13], %45 {strides = array<i32>} : memref<1x8x384xf32, #tpu.memory_space<vmem>>, vector<1x8x384xf32>,
    %46 = vector.broadcast %3 : vector<1x384xf32> to vector<8x384xf32>
    %47 = arith.mulf %42, %46 : vector<8x384xf32>
    %cst_14 = arith.constant dense<0.000000e+00> : vector<8xf32>
    %48 = vector.multi_reduction <add>, %47, %cst_14 [1] : vector<8x384xf32> to vector<8xf32>
    %49 = vector.shape_cast %48 : vector<8xf32> to vector<8x1xf32>
    %50 = arith.mulf %47, %42 : vector<8x384xf32>
    %cst_15 = arith.constant dense<0.000000e+00> : vector<8xf32>
    %51 = vector.multi_reduction <add>, %50, %cst_15 [1] : vector<8x384xf32> to vector<8xf32>
    %52 = vector.shape_cast %51 : vector<8xf32> to vector<8x1xf32>
    %c0_16 = arith.constant 0 : index
    %c0_17 = arith.constant 0 : index
    %53 = vector.load %arg6[%c0_16, %c0_17] : memref<8x2xf32, #tpu.memory_space<vmem>>, vector<8x2xf32>
    %54 = tpu.concatenate %49, %52 in 1 : vector<8x1xf32>, vector<8x1xf32> -> vector<8x2xf32>
    %55 = arith.addf %53, %54 : vector<8x2xf32>
    %c0_18 = arith.constant 0 : index
    %c0_19 = arith.constant 0 : index
    %56 = vector.load %arg6[%c0_18, %c0_19] : memref<8x2xf32, #tpu.memory_space<vmem>>, vector<8x2xf32>
    tpu.vector_store %arg6[%c0_18, %c0_19], %55 {strides = array<i32>} : memref<8x2xf32, #tpu.memory_space<vmem>>, vector<8x2xf32>,
    return
  }
  func.func @transform_0(%arg0: i32) -> (i32, i32, i32) {
    %c0_i32 = arith.constant 0 : i32
    %c0_i32_0 = arith.constant 0 : i32
    %c0_i32_1 = arith.constant 0 : i32
    return %arg0, %c0_i32, %c0_i32_0 : i32, i32, i32
  }
  func.func @transform_1(%arg0: i32) -> (i32, i32) {
    %c0_i32 = arith.constant 0 : i32
    %c0_i32_0 = arith.constant 0 : i32
    %c0_i32_1 = arith.constant 0 : i32
    return %c0_i32, %c0_i32_0 : i32, i32
  }
  func.func @transform_2(%arg0: i32) -> (i32, i32) {
    %c0_i32 = arith.constant 0 : i32
    %c0_i32_0 = arith.constant 0 : i32
    %c0_i32_1 = arith.constant 0 : i32
    return %c0_i32, %c0_i32_0 : i32, i32
  }
  func.func @transform_3(%arg0: i32) -> (i32, i32) {
    %c0_i32 = arith.constant 0 : i32
    %c0_i32_0 = arith.constant 0 : i32
    %c0_i32_1 = arith.constant 0 : i32
    return %c0_i32, %c0_i32_0 : i32, i32
  }
  func.func @transform_4(%arg0: i32) -> (i32, i32, i32) {
    %c0_i32 = arith.constant 0 : i32
    %c0_i32_0 = arith.constant 0 : i32
    %c0_i32_1 = arith.constant 0 : i32
    return %arg0, %c0_i32, %c0_i32_0 : i32, i32, i32
  }
  func.func @transform_5(%arg0: i32) -> (i32, i32) {
    %c0_i32 = arith.constant 0 : i32
    %c0_i32_0 = arith.constant 0 : i32
    %c0_i32_1 = arith.constant 0 : i32
    return %c0_i32, %c0_i32_0 : i32, i32
  }
}

module attributes {stable_mosaic.version = 11 : i64} {
  func.func @_finalize_kernel(%arg0: i32, %arg1: memref<1x8x384xf32, #tpu.memory_space<vmem>>, %arg2: memref<1x8x384xf32, #tpu.memory_space<vmem>>, %arg3: memref<8x2xf32, #tpu.memory_space<vmem>>, %arg4: memref<1x384xf32, #tpu.memory_space<vmem>>, %arg5: memref<1x8x384xf32, #tpu.memory_space<vmem>>) attributes {dimension_semantics = [#tpu.dimension_semantics<parallel>], iteration_bounds = array<i64: 2>, scalar_prefetch = 0 : i64, scratch_operands = 0 : i64, tpu.core_type = #tpu.core_type<tc>, window_params = [{transform_indices = @transform_0, window_bounds = array<i64: 1, 8, 384>}, {transform_indices = @transform_1, window_bounds = array<i64: 1, 8, 384>}, {pipeline_mode = #tpu.pipeline_mode<synchronous>, transform_indices = @transform_2, window_bounds = array<i64: 8, 2>}, {pipeline_mode = #tpu.pipeline_mode<synchronous>, transform_indices = @transform_3, window_bounds = array<i64: 1, 384>}, {transform_indices = @transform_4, window_bounds = array<i64: 1, 8, 384>}]} {
    %c0 = arith.constant 0 : index
    %c0_0 = arith.constant 0 : index
    %c0_1 = arith.constant 0 : index
    %0 = vector.load %arg1[%c0, %c0_0, %c0_1] : memref<1x8x384xf32, #tpu.memory_space<vmem>>, vector<1x8x384xf32>
    %1 = vector.shape_cast %0 : vector<1x8x384xf32> to vector<8x384xf32>
    %c0_2 = arith.constant 0 : index
    %c0_3 = arith.constant 0 : index
    %2 = vector.load %arg3[%c0_2, %c0_3] : memref<8x2xf32, #tpu.memory_space<vmem>>, vector<8x1xf32>
    %c0_4 = arith.constant 0 : index
    %c1 = arith.constant 1 : index
    %3 = vector.load %arg3[%c0_4, %c1] : memref<8x2xf32, #tpu.memory_space<vmem>>, vector<8x1xf32>
    %c0_5 = arith.constant 0 : index
    %c0_6 = arith.constant 0 : index
    %4 = vector.load %arg4[%c0_5, %c0_6] : memref<1x384xf32, #tpu.memory_space<vmem>>, vector<1x384xf32>
    %5 = vector.broadcast %2 : vector<8x1xf32> to vector<8x384xf32>
    %6 = arith.mulf %1, %5 : vector<8x384xf32>
    %7 = vector.broadcast %3 : vector<8x1xf32> to vector<8x384xf32>
    %8 = arith.addf %6, %7 : vector<8x384xf32>
    %9 = vector.broadcast %4 : vector<1x384xf32> to vector<8x384xf32>
    %10 = arith.mulf %9, %8 : vector<8x384xf32>
    %c0_7 = arith.constant 0 : index
    %c0_8 = arith.constant 0 : index
    %c0_9 = arith.constant 0 : index
    %11 = vector.load %arg2[%c0_7, %c0_8, %c0_9] : memref<1x8x384xf32, #tpu.memory_space<vmem>>, vector<1x8x384xf32>
    %12 = vector.shape_cast %11 : vector<1x8x384xf32> to vector<8x384xf32>
    %13 = arith.addf %10, %12 : vector<8x384xf32>
    %cst = arith.constant 0.000000e+00 : f32
    %14 = vector.broadcast %cst : f32 to vector<8x384xf32>
    %15 = arith.maximumf %13, %14 : vector<8x384xf32>
    %c0_10 = arith.constant 0 : index
    %c0_11 = arith.constant 0 : index
    %c0_12 = arith.constant 0 : index
    %16 = vector.load %arg5[%c0_10, %c0_11, %c0_12] : memref<1x8x384xf32, #tpu.memory_space<vmem>>, vector<1x8x384xf32>
    %17 = vector.shape_cast %16 : vector<1x8x384xf32> to vector<8x384xf32>
    %18 = vector.shape_cast %15 : vector<8x384xf32> to vector<1x8x384xf32>
    tpu.vector_store %arg5[%c0_10, %c0_11, %c0_12], %18 {strides = array<i32>} : memref<1x8x384xf32, #tpu.memory_space<vmem>>, vector<1x8x384xf32>,
    return
  }
  func.func @transform_0(%arg0: i32) -> (i32, i32, i32) {
    %c0_i32 = arith.constant 0 : i32
    %c0_i32_0 = arith.constant 0 : i32
    %c0_i32_1 = arith.constant 0 : i32
    return %arg0, %c0_i32, %c0_i32_0 : i32, i32, i32
  }
  func.func @transform_1(%arg0: i32) -> (i32, i32, i32) {
    %c0_i32 = arith.constant 0 : i32
    %c0_i32_0 = arith.constant 0 : i32
    %c0_i32_1 = arith.constant 0 : i32
    return %arg0, %c0_i32, %c0_i32_0 : i32, i32, i32
  }
  func.func @transform_2(%arg0: i32) -> (i32, i32) {
    %c0_i32 = arith.constant 0 : i32
    %c0_i32_0 = arith.constant 0 : i32
    %c0_i32_1 = arith.constant 0 : i32
    return %c0_i32, %c0_i32_0 : i32, i32
  }
  func.func @transform_3(%arg0: i32) -> (i32, i32) {
    %c0_i32 = arith.constant 0 : i32
    %c0_i32_0 = arith.constant 0 : i32
    %c0_i32_1 = arith.constant 0 : i32
    return %c0_i32, %c0_i32_0 : i32, i32
  }
  func.func @transform_4(%arg0: i32) -> (i32, i32, i32) {
    %c0_i32 = arith.constant 0 : i32
    %c0_i32_0 = arith.constant 0 : i32
    %c0_i32_1 = arith.constant 0 : i32
    return %arg0, %c0_i32, %c0_i32_0 : i32, i32, i32
  }
}

</mosaic_0001>

<llo_original>
// kernel: basic_block_forward.5
$region0: #{basic_block_forward.5}
  #allocation0 [shape = 'u32[]', space=smem, size = 0x4, offset = 0x4, fixed_abs, tag = 'smem constant byte address 0x4 - core index']
  #allocation1 [shape = 'u32[144,128]{1,0:T(1,128)}', space=vmem, size = 0x12000, scoped, tag = 'internal scratch']
  %s0 = inlined_call_operand.vmem [shape: f32[2,8,384], index: 0, kind: input, shape index: {}]
  %s1 = inlined_call_operand.vmem [shape: f32[2,8,384], index: 1, kind: input, shape index: {}]
  %s2 = inlined_call_operand.vmem [shape: f32[8,2], index: 2, kind: input, shape index: {}]
  %s3 = inlined_call_operand.vmem [shape: f32[1,384], index: 3, kind: input, shape index: {}]
  %s4 = inlined_call_operand.vmem [shape: f32[2,8,384], index: 4, kind: output, shape index: {}]
  %s5 = sld [smem:[#allocation0]]
  $region49: #{basic_block_forward.5} parent=0
    _
  %s7 = ssub.s32 1, %s5
  %s8 = scalar_select 0, %s7, %s5
  loop: start=0, step=1, limit=4
  $region2: #{basic_block_forward.5} parent=0 // loop_pre_header
    _
  $region3: #{basic_block_forward.5} parent=0 // loop_header
    %s10 = sphi 0, %s14
    %p11 = scmp.ge.s32.totalorder %s10, 4
    %s20 = sphi 0, %s22
    %s23 = sphi 0, %s20
    %s24 = sphi 0, %s23
    %s40 = sphi 0, %s24
    %s46 = sphi 0, %s48
    %s49 = sphi 0, %s46
    %s50 = sphi 0, %s49
    %s66 = sphi 0, %s50
    %s70 = sphi 0, %s70
    %s72 = sphi 0, %s70
    %s73 = sphi 0, %s72
    %s87 = sphi 0, %s73
    %s91 = sphi 0, %s91
    %s93 = sphi 0, %s91
    %s94 = sphi 0, %s93
    %s108 = sphi 0, %s94
    %s114 = sphi 0, %s116
    %s117 = sphi 0, %s114
    %s118 = sphi 0, %s117
    %s134 = sphi 0, %s118
  $region4: #{basic_block_forward.5} parent=0 // loop_header_branch
    %13 = sbr.rel (%p11) target = $region8
  $region5: #{basic_block_forward.5} parent=0 // loop_body
    %s15 = ssub.s32 %s10, 1
    %s16 = ssub.s32 %s10, 2
    %s17 = sadd.s32 %s10, 1
    %s18 = ssub.s32 %s10, %s17
    %p19 = scmp.eq.s32.totalorder %s18, 0
    %s21 = sadd.s32 %s20, 1
    %s22 = scalar_select %p19, %s20, %s21
    %p25 = pneg %p19
    %p26 = scmp.eq.s32.totalorder %s10, 1
    %p27 = por %p25, %p26
    %p28 = scmp.ne.s32.totalorder %s20, %s23
    %p29 = scmp.eq.s32.totalorder %s10, 0
    %p30 = por %p28, %p29
    %p31 = scmp.ne.s32.totalorder %s20, %s23
    %p32 = scmp.eq.s32.totalorder %s15, 1
    %p33 = por %p31, %p32
    %p34 = scmp.ne.s32.totalorder %s23, %s24
    %p35 = scmp.eq.s32.totalorder %s15, 0
    %p36 = por %p34, %p35
    %p37 = scmp.ne.s32.totalorder %s23, %s24
    %p38 = scmp.eq.s32.totalorder %s16, 1
    %p39 = por %p37, %p38
    %p41 = scmp.ne.s32.totalorder %s24, %s40
    %p42 = scmp.eq.s32.totalorder %s16, 0
    %p43 = por %p41, %p42
    %s44 = ssub.s32 %s10, %s17
    %p45 = scmp.eq.s32.totalorder %s44, 0
    %s47 = sadd.s32 %s46, 1
    %s48 = scalar_select %p45, %s46, %s47
    %p51 = pneg %p45
    %p52 = scmp.eq.s32.totalorder %s10, 1
    %p53 = por %p51, %p52
    %p54 = scmp.ne.s32.totalorder %s46, %s49
    %p55 = scmp.eq.s32.totalorder %s10, 0
    %p56 = por %p54, %p55
    %p57 = scmp.ne.s32.totalorder %s46, %s49
    %p58 = scmp.eq.s32.totalorder %s15, 1
    %p59 = por %p57, %p58
    %p60 = scmp.ne.s32.totalorder %s49, %s50
    %p61 = scmp.eq.s32.totalorder %s15, 0
    %p62 = por %p60, %p61
    %p63 = scmp.ne.s32.totalorder %s49, %s50
    %p64 = scmp.eq.s32.totalorder %s16, 1
    %p65 = por %p63, %p64
    %p67 = scmp.ne.s32.totalorder %s50, %s66
    %p68 = scmp.eq.s32.totalorder %s16, 0
    %p69 = por %p67, %p68
    %s71 = sadd.s32 %s70, 1
    %p74 = scmp.eq.s32.totalorder %s10, 1
    %p75 = scmp.ne.s32.totalorder %s70, %s72
    %p76 = scmp.eq.s32.totalorder %s10, 0
    %p77 = por %p75, %p76
    %p78 = scmp.ne.s32.totalorder %s70, %s72
    %p79 = scmp.eq.s32.totalorder %s15, 1
    %p80 = por %p78, %p79
    %p81 = scmp.ne.s32.totalorder %s72, %s73
    %p82 = scmp.eq.s32.totalorder %s15, 0
    %p83 = por %p81, %p82
    %p84 = scmp.ne.s32.totalorder %s72, %s73
    %p85 = scmp.eq.s32.totalorder %s16, 1
    %p86 = por %p84, %p85
    %p88 = scmp.ne.s32.totalorder %s73, %s87
    %p89 = scmp.eq.s32.totalorder %s16, 0
    %p90 = por %p88, %p89
    %s92 = sadd.s32 %s91, 1
    %p95 = scmp.eq.s32.totalorder %s10, 1
    %p96 = scmp.ne.s32.totalorder %s91, %s93
    %p97 = scmp.eq.s32.totalorder %s10, 0
    %p98 = por %p96, %p97
    %p99 = scmp.ne.s32.totalorder %s91, %s93
    %p100 = scmp.eq.s32.totalorder %s15, 1
    %p101 = por %p99, %p100
    %p102 = scmp.ne.s32.totalorder %s93, %s94
    %p103 = scmp.eq.s32.totalorder %s15, 0
    %p104 = por %p102, %p103
    %p105 = scmp.ne.s32.totalorder %s93, %s94
    %p106 = scmp.eq.s32.totalorder %s16, 1
    %p107 = por %p105, %p106
    %p109 = scmp.ne.s32.totalorder %s94, %s108
    %p110 = scmp.eq.s32.totalorder %s16, 0
    %p111 = por %p109, %p110
    %s112 = ssub.s32 %s10, %s17
    %p113 = scmp.eq.s32.totalorder %s112, 0
    %s115 = sadd.s32 %s114, 1
    %s116 = scalar_select %p113, %s114, %s115
    %p119 = pneg %p113
    %p120 = scmp.eq.s32.totalorder %s10, 1
    %p121 = por %p119, %p120
    %p122 = scmp.ne.s32.totalorder %s114, %s117
    %p123 = scmp.eq.s32.totalorder %s10, 0
    %p124 = por %p122, %p123
    %p125 = scmp.ne.s32.totalorder %s114, %s117
    %p126 = scmp.eq.s32.totalorder %s15, 1
    %p127 = por %p125, %p126
    %p128 = scmp.ne.s32.totalorder %s117, %s118
    %p129 = scmp.eq.s32.totalorder %s15, 0
    %p130 = por %p128, %p129
    %p131 = scmp.ne.s32.totalorder %s117, %s118
    %p132 = scmp.eq.s32.totalorder %s16, 1
    %p133 = por %p131, %p132
    %p135 = scmp.ne.s32.totalorder %s118, %s134
    %p136 = scmp.eq.s32.totalorder %s16, 0
    %p137 = por %p135, %p136
    %p138 = scmp.le.s32.totalorder 1, %s10
    %p139 = scmp.lt.s32.totalorder %s10, 3
    %p140 = pnand %p138, %p139
    %p141 = pneg %p140
    // Predicated region
    $region9: #{basic_block_forward.5} parent=5 // pred_check
      _
    $region10: #{basic_block_forward.5} parent=5 // pred_check_branch
      %143 = sbr.rel (%p140) target = $region12
    $region11: #{basic_block_forward.5} parent=5 // pred_region
      %s144 = ssub.s32 %s10, 1
      // Predicated region
      $region13: #{basic_block_forward.5} parent=11 // pred_check
        %p145 = pneg %p83
      $region14: #{basic_block_forward.5} parent=11 // pred_check_branch
        %147 = sbr.rel (%p145) target = $region16
      $region15: #{basic_block_forward.5} parent=11 // pred_region
        _
      $region16: #{basic_block_forward.5} parent=11 // pred_fallthru
        _
      // Predicated region
      $region17: #{basic_block_forward.5} parent=11 // pred_check
        %p148 = pneg %p104
      $region18: #{basic_block_forward.5} parent=11 // pred_check_branch
        %150 = sbr.rel (%p148) target = $region20
      $region19: #{basic_block_forward.5} parent=11 // pred_region
        _
      $region20: #{basic_block_forward.5} parent=11 // pred_fallthru
        _
    $region12: #{basic_block_forward.5} parent=5 // pred_fallthru
      _
    %p151 = scmp.lt.s32.totalorder %s10, 2
    // Predicated region
    $region21: #{basic_block_forward.5} parent=5 // pred_check
      %p152 = pneg %p151
    $region22: #{basic_block_forward.5} parent=5 // pred_check_branch
      %154 = sbr.rel (%p152) target = $region24
    $region23: #{basic_block_forward.5} parent=5 // pred_region
      // Predicated region
      $region25: #{basic_block_forward.5} parent=23 // pred_check
        %p155 = pneg %p30
      $region26: #{basic_block_forward.5} parent=23 // pred_check_branch
        %157 = sbr.rel (%p155) target = $region28
      $region27: #{basic_block_forward.5} parent=23 // pred_region
        %p158 = scmp.lt.s32.totalorder %s10, 1
        %s159 = scalar_select %p158, %s10, 1
        %s160 = smul.addr %s159, 3
        %s161 = smul.addr %s160, 8
        %s162 = scalar_lea.vmem %s0, %s161
      $region28: #{basic_block_forward.5} parent=23 // pred_fallthru
        _
      // Predicated region
      $region29: #{basic_block_forward.5} parent=23 // pred_check
        %p163 = pneg %p56
      $region30: #{basic_block_forward.5} parent=23 // pred_check_branch
        %165 = sbr.rel (%p163) target = $region32
      $region31: #{basic_block_forward.5} parent=23 // pred_region
        %p166 = scmp.lt.s32.totalorder %s10, 1
        %s167 = scalar_select %p166, %s10, 1
        %s168 = smul.addr %s167, 3
        %s169 = smul.addr %s168, 8
        %s170 = scalar_lea.vmem %s1, %s169
      $region32: #{basic_block_forward.5} parent=23 // pred_fallthru
        _
    $region24: #{basic_block_forward.5} parent=5 // pred_fallthru
      _
    %p171 = scmp.le.s32.totalorder 1, %s10
    %p172 = scmp.lt.s32.totalorder %s10, 3
    %p173 = pnand %p171, %p172
    %p174 = pneg %p173
    // Predicated region
    $region33: #{basic_block_forward.5} parent=5 // pred_check
      _
    $region34: #{basic_block_forward.5} parent=5 // pred_check_branch
      %176 = sbr.rel (%p173) target = $region36
    $region35: #{basic_block_forward.5} parent=5 // pred_region
      %s177 = ssub.s32 %s10, 1
      %p178 = scmp.lt.s32.totalorder %s15, 1
      %s179 = scalar_select %p178, %s15, 1
      %s180 = smul.addr %s179, 3
      %s181 = smul.addr %s180, 8
      %s182 = scalar_lea.vmem %s0, %s181
      %p183 = pneg %p36
      %p184 = pneg %p33
      %p185 = scmp.lt.s32.totalorder %s15, 1
      %s186 = scalar_select %p185, %s15, 1
      %s187 = smul.addr %s186, 3
      %s188 = smul.addr %s187, 8
      %s189 = scalar_lea.vmem %s1, %s188
      %p190 = pneg %p62
      %p191 = pneg %p59
      %p192 = pneg %p83
      %p193 = pneg %p80
      %p194 = pneg %p104
      %p195 = pneg %p101
      %p196 = pneg %p130
      %p197 = pneg %p127
      %p198 = scmp.lt.s32.totalorder %s15, 1
      %s199 = scalar_select %p198, %s15, 1
      %s200 = smul.addr %s199, 3
      %s201 = smul.addr %s200, 8
      %s202 = scalar_lea.vmem %s4, %s201
      %p203 = scmp.lt.s32.totalorder %s15, 1
      %s204 = scalar_select %p203, %s15, 1
      %s205 = smul.addr %s204, 3
      %s206 = smul.addr %s205, 8
      %s207 = scalar_lea.vmem %s0, %s206
      %p208 = scmp.lt.s32.totalorder %s15, 1
      %s209 = scalar_select %p208, %s15, 1
      %s210 = smul.addr %s209, 3
      %s211 = smul.addr %s210, 8
      %s212 = scalar_lea.vmem %s1, %s211
      %p213 = scmp.lt.s32.totalorder %s15, 1
      %s214 = scalar_select %p213, %s15, 1
      %s215 = smul.addr %s214, 3
      %s216 = smul.addr %s215, 8
      %s217 = scalar_lea.vmem %s4, %s216
      %v218 = vld [vmem:[%s207] sm:$0xff]
      %v219 = vld [vmem:[%s207 + $0x8] sm:$0xff]
      %v220 = vld [vmem:[%s207 + $0x10] sm:$0xff]
      %v221 = vld [vmem:[%s2] sm:$0xff]
      %v222 = vld [vmem:[%s3] sm:$0x7]
      %224 = vset.pattern.permute.xlu0 0
      %225 = vperm.xlu0 %224, %v221
      %v226 = vpop.permute.xlu0 %225
      %v228 = vmul.f32 %v218, %v226
      %v229 = vmul.f32 %v219, %v226
      %v230 = vmul.f32 %v220, %v226
      %231 = vset.pattern.permute.xlu0 1
      %232 = vperm.xlu0 %231, %v221
      %v233 = vpop.permute.xlu0 %232
      %v235 = vadd.f32 %v228, %v233
      %v236 = vadd.f32 %v229, %v233
      %v237 = vadd.f32 %v230, %v233
      %v239 = vlaneseq
      %v240 = vshrl.u32 %v239, 7
      %v241 = vsub.s32 0, %v240
      %v242 = vrot.slane %v222, %v241
      %v243 = vlaneseq
      %v244 = vshrl.u32 %v243, 7
      %v245 = vsub.s32 1, %v244
      %v246 = vrot.slane %v222, %v245
      %v247 = vlaneseq
      %v248 = vshrl.u32 %v247, 7
      %v249 = vsub.s32 2, %v248
      %v250 = vrot.slane %v222, %v249
      %v254 = vmul.f32 %v242, %v235
      %v255 = vmul.f32 %v246, %v236
      %v256 = vmul.f32 %v250, %v237
      %v257 = vld [vmem:[%s212] sm:$0xff]
      %v258 = vld [vmem:[%s212 + $0x8] sm:$0xff]
      %v259 = vld [vmem:[%s212 + $0x10] sm:$0xff]
      %v260 = vadd.f32 %v254, %v257
      %v261 = vadd.f32 %v255, %v258
      %v262 = vadd.f32 %v256, %v259
      %v263 = vmax.f32 %v260, 0.0
      %v264 = vmax.f32 %v261, 0.0
      %v265 = vmax.f32 %v262, 0.0
      %266 = vst [vmem:[%s217] sm:$0xff] %v263
      %267 = vst [vmem:[%s217 + $0x8] sm:$0xff] %v264
      %268 = vst [vmem:[%s217 + $0x10] sm:$0xff] %v265
      %p269 = scmp.lt.s32.totalorder %s15, 1
      %s270 = scalar_select %p269, %s15, 1
      %s271 = smul.addr %s270, 3
      %s272 = smul.addr %s271, 8
      %s273 = scalar_lea.vmem %s4, %s272
      // Predicated region
      $region37: #{basic_block_forward.5} parent=35 // pred_check
        %p274 = pneg %p127
      $region38: #{basic_block_forward.5} parent=35 // pred_check_branch
        %276 = sbr.rel (%p274) target = $region40
      $region39: #{basic_block_forward.5} parent=35 // pred_region
        _
      $region40: #{basic_block_forward.5} parent=35 // pred_fallthru
        _
    $region36: #{basic_block_forward.5} parent=5 // pred_fallthru
      _
    %p277 = scmp.le.s32.totalorder 2, %s10
    // Predicated region
    $region41: #{basic_block_forward.5} parent=5 // pred_check
      %p278 = pneg %p277
    $region42: #{basic_block_forward.5} parent=5 // pred_check_branch
      %280 = sbr.rel (%p278) target = $region44
    $region43: #{basic_block_forward.5} parent=5 // pred_region
      %s281 = ssub.s32 %s10, 2
      // Predicated region
      $region45: #{basic_block_forward.5} parent=43 // pred_check
        %p282 = pneg %p133
      $region46: #{basic_block_forward.5} parent=43 // pred_check_branch
        %284 = sbr.rel (%p282) target = $region48
      $region47: #{basic_block_forward.5} parent=43 // pred_region
        %p285 = scmp.lt.s32.totalorder %s16, 1
        %s286 = scalar_select %p285, %s16, 1
        %s287 = smul.addr %s286, 3
        %s288 = smul.addr %s287, 8
        %s289 = scalar_lea.vmem %s4, %s288
      $region48: #{basic_block_forward.5} parent=43 // pred_fallthru
        _
    $region44: #{basic_block_forward.5} parent=5 // pred_fallthru
      _
  $region6: #{basic_block_forward.5} parent=0 // loop_footer
    %s14 = sadd.s32 1, %s10
  $region7: #{basic_block_forward.5} parent=0 // loop_footer_branch
    %9 = sbr.rel target = $region3
  $region8: #{basic_block_forward.5} parent=0 // loop_exit
    _

// kernel: basic_block_forward.4
$region0: #{basic_block_forward.4}
  #allocation0 [shape = 'u32[]', space=smem, size = 0x4, offset = 0x4, fixed_abs, tag = 'smem constant byte address 0x4 - core index']
  #allocation1 [shape = 'u32[144,128]{1,0:T(1,128)}', space=vmem, size = 0x12000, scoped, tag = 'internal scratch']
  %s0 = inlined_call_operand.vmem [shape: f32[2,8,384], index: 0, kind: input, shape index: {}]
  %s1 = inlined_call_operand.vmem [shape: f32[8,72], index: 1, kind: input, shape index: {}]
  %s2 = inlined_call_operand.vmem [shape: f32[8,2], index: 2, kind: input, shape index: {}]
  %s3 = inlined_call_operand.vmem [shape: f32[1,384], index: 3, kind: input, shape index: {}]
  %s4 = inlined_call_operand.vmem [shape: f32[2,8,384], index: 4, kind: output, shape index: {0}]
  %s5 = inlined_call_operand.vmem [shape: f32[8,2], index: 5, kind: output, shape index: {1}]
  %6 = xla_tuple %s4, %s5
  %s7 = sld [smem:[#allocation0]]
  $region61: #{basic_block_forward.4} parent=0
    _
  %s9 = ssub.s32 1, %s7
  %s10 = scalar_select 0, %s9, %s7
  loop: start=0, step=1, limit=4
  $region2: #{basic_block_forward.4} parent=0 // loop_pre_header
    _
  $region3: #{basic_block_forward.4} parent=0 // loop_header
    %s12 = sphi 0, %s16
    %p13 = scmp.ge.s32.totalorder %s12, 4
    %s22 = sphi 0, %s24
    %s25 = sphi 0, %s22
    %s26 = sphi 0, %s25
    %s42 = sphi 0, %s26
    %s46 = sphi 0, %s46
    %s48 = sphi 0, %s46
    %s49 = sphi 0, %s48
    %s63 = sphi 0, %s49
    %s67 = sphi 0, %s67
    %s69 = sphi 0, %s67
    %s70 = sphi 0, %s69
    %s84 = sphi 0, %s70
    %s88 = sphi 0, %s88
    %s90 = sphi 0, %s88
    %s91 = sphi 0, %s90
    %s105 = sphi 0, %s91
    %s111 = sphi 0, %s113
    %s114 = sphi 0, %s111
    %s115 = sphi 0, %s114
    %s131 = sphi 0, %s115
    %s135 = sphi 0, %s135
    %s137 = sphi 0, %s135
    %s138 = sphi 0, %s137
    %s152 = sphi 0, %s138
  $region4: #{basic_block_forward.4} parent=0 // loop_header_branch
    %15 = sbr.rel (%p13) target = $region8
  $region5: #{basic_block_forward.4} parent=0 // loop_body
    %s17 = ssub.s32 %s12, 1
    %s18 = ssub.s32 %s12, 2
    %s19 = sadd.s32 %s12, 1
    %s20 = ssub.s32 %s12, %s19
    %p21 = scmp.eq.s32.totalorder %s20, 0
    %s23 = sadd.s32 %s22, 1
    %s24 = scalar_select %p21, %s22, %s23
    %p27 = pneg %p21
    %p28 = scmp.eq.s32.totalorder %s12, 1
    %p29 = por %p27, %p28
    %p30 = scmp.ne.s32.totalorder %s22, %s25
    %p31 = scmp.eq.s32.totalorder %s12, 0
    %p32 = por %p30, %p31
    %p33 = scmp.ne.s32.totalorder %s22, %s25
    %p34 = scmp.eq.s32.totalorder %s17, 1
    %p35 = por %p33, %p34
    %p36 = scmp.ne.s32.totalorder %s25, %s26
    %p37 = scmp.eq.s32.totalorder %s17, 0
    %p38 = por %p36, %p37
    %p39 = scmp.ne.s32.totalorder %s25, %s26
    %p40 = scmp.eq.s32.totalorder %s18, 1
    %p41 = por %p39, %p40
    %p43 = scmp.ne.s32.totalorder %s26, %s42
    %p44 = scmp.eq.s32.totalorder %s18, 0
    %p45 = por %p43, %p44
    %s47 = sadd.s32 %s46, 1
    %p50 = scmp.eq.s32.totalorder %s12, 1
    %p51 = scmp.ne.s32.totalorder %s46, %s48
    %p52 = scmp.eq.s32.totalorder %s12, 0
    %p53 = por %p51, %p52
    %p54 = scmp.ne.s32.totalorder %s46, %s48
    %p55 = scmp.eq.s32.totalorder %s17, 1
    %p56 = por %p54, %p55
    %p57 = scmp.ne.s32.totalorder %s48, %s49
    %p58 = scmp.eq.s32.totalorder %s17, 0
    %p59 = por %p57, %p58
    %p60 = scmp.ne.s32.totalorder %s48, %s49
    %p61 = scmp.eq.s32.totalorder %s18, 1
    %p62 = por %p60, %p61
    %p64 = scmp.ne.s32.totalorder %s49, %s63
    %p65 = scmp.eq.s32.totalorder %s18, 0
    %p66 = por %p64, %p65
    %s68 = sadd.s32 %s67, 1
    %p71 = scmp.eq.s32.totalorder %s12, 1
    %p72 = scmp.ne.s32.totalorder %s67, %s69
    %p73 = scmp.eq.s32.totalorder %s12, 0
    %p74 = por %p72, %p73
    %p75 = scmp.ne.s32.totalorder %s67, %s69
    %p76 = scmp.eq.s32.totalorder %s17, 1
    %p77 = por %p75, %p76
    %p78 = scmp.ne.s32.totalorder %s69, %s70
    %p79 = scmp.eq.s32.totalorder %s17, 0
    %p80 = por %p78, %p79
    %p81 = scmp.ne.s32.totalorder %s69, %s70
    %p82 = scmp.eq.s32.totalorder %s18, 1
    %p83 = por %p81, %p82
    %p85 = scmp.ne.s32.totalorder %s70, %s84
    %p86 = scmp.eq.s32.totalorder %s18, 0
    %p87 = por %p85, %p86
    %s89 = sadd.s32 %s88, 1
    %p92 = scmp.eq.s32.totalorder %s12, 1
    %p93 = scmp.ne.s32.totalorder %s88, %s90
    %p94 = scmp.eq.s32.totalorder %s12, 0
    %p95 = por %p93, %p94
    %p96 = scmp.ne.s32.totalorder %s88, %s90
    %p97 = scmp.eq.s32.totalorder %s17, 1
    %p98 = por %p96, %p97
    %p99 = scmp.ne.s32.totalorder %s90, %s91
    %p100 = scmp.eq.s32.totalorder %s17, 0
    %p101 = por %p99, %p100
    %p102 = scmp.ne.s32.totalorder %s90, %s91
    %p103 = scmp.eq.s32.totalorder %s18, 1
    %p104 = por %p102, %p103
    %p106 = scmp.ne.s32.totalorder %s91, %s105
    %p107 = scmp.eq.s32.totalorder %s18, 0
    %p108 = por %p106, %p107
    %s109 = ssub.s32 %s12, %s19
    %p110 = scmp.eq.s32.totalorder %s109, 0
    %s112 = sadd.s32 %s111, 1
    %s113 = scalar_select %p110, %s111, %s112
    %p116 = pneg %p110
    %p117 = scmp.eq.s32.totalorder %s12, 1
    %p118 = por %p116, %p117
    %p119 = scmp.ne.s32.totalorder %s111, %s114
    %p120 = scmp.eq.s32.totalorder %s12, 0
    %p121 = por %p119, %p120
    %p122 = scmp.ne.s32.totalorder %s111, %s114
    %p123 = scmp.eq.s32.totalorder %s17, 1
    %p124 = por %p122, %p123
    %p125 = scmp.ne.s32.totalorder %s114, %s115
    %p126 = scmp.eq.s32.totalorder %s17, 0
    %p127 = por %p125, %p126
    %p128 = scmp.ne.s32.totalorder %s114, %s115
    %p129 = scmp.eq.s32.totalorder %s18, 1
    %p130 = por %p128, %p129
    %p132 = scmp.ne.s32.totalorder %s115, %s131
    %p133 = scmp.eq.s32.totalorder %s18, 0
    %p134 = por %p132, %p133
    %s136 = sadd.s32 %s135, 1
    %p139 = scmp.eq.s32.totalorder %s12, 1
    %p140 = scmp.ne.s32.totalorder %s135, %s137
    %p141 = scmp.eq.s32.totalorder %s12, 0
    %p142 = por %p140, %p141
    %p143 = scmp.ne.s32.totalorder %s135, %s137
    %p144 = scmp.eq.s32.totalorder %s17, 1
    %p145 = por %p143, %p144
    %p146 = scmp.ne.s32.totalorder %s137, %s138
    %p147 = scmp.eq.s32.totalorder %s17, 0
    %p148 = por %p146, %p147
    %p149 = scmp.ne.s32.totalorder %s137, %s138
    %p150 = scmp.eq.s32.totalorder %s18, 1
    %p151 = por %p149, %p150
    %p153 = scmp.ne.s32.totalorder %s138, %s152
    %p154 = scmp.eq.s32.totalorder %s18, 0
    %p155 = por %p153, %p154
    %p156 = scmp.le.s32.totalorder 1, %s12
    %p157 = scmp.lt.s32.totalorder %s12, 3
    %p158 = pnand %p156, %p157
    %p159 = pneg %p158
    // Predicated region
    $region9: #{basic_block_forward.4} parent=5 // pred_check
      _
    $region10: #{basic_block_forward.4} parent=5 // pred_check_branch
      %161 = sbr.rel (%p158) target = $region12
    $region11: #{basic_block_forward.4} parent=5 // pred_region
      %s162 = ssub.s32 %s12, 1
      // Predicated region
      $region13: #{basic_block_forward.4} parent=11 // pred_check
        %p163 = pneg %p59
      $region14: #{basic_block_forward.4} parent=11 // pred_check_branch
        %165 = sbr.rel (%p163) target = $region16
      $region15: #{basic_block_forward.4} parent=11 // pred_region
        _
      $region16: #{basic_block_forward.4} parent=11 // pred_fallthru
        _
      // Predicated region
      $region17: #{basic_block_forward.4} parent=11 // pred_check
        %p166 = pneg %p80
      $region18: #{basic_block_forward.4} parent=11 // pred_check_branch
        %168 = sbr.rel (%p166) target = $region20
      $region19: #{basic_block_forward.4} parent=11 // pred_region
        _
      $region20: #{basic_block_forward.4} parent=11 // pred_fallthru
        _
      // Predicated region
      $region21: #{basic_block_forward.4} parent=11 // pred_check
        %p169 = pneg %p101
      $region22: #{basic_block_forward.4} parent=11 // pred_check_branch
        %171 = sbr.rel (%p169) target = $region24
      $region23: #{basic_block_forward.4} parent=11 // pred_region
        _
      $region24: #{basic_block_forward.4} parent=11 // pred_fallthru
        _
    $region12: #{basic_block_forward.4} parent=5 // pred_fallthru
      _
    %p172 = scmp.lt.s32.totalorder %s12, 2
    // Predicated region
    $region25: #{basic_block_forward.4} parent=5 // pred_check
      %p173 = pneg %p172
    $region26: #{basic_block_forward.4} parent=5 // pred_check_branch
      %175 = sbr.rel (%p173) target = $region28
    $region27: #{basic_block_forward.4} parent=5 // pred_region
      // Predicated region
      $region29: #{basic_block_forward.4} parent=27 // pred_check
        %p176 = pneg %p32
      $region30: #{basic_block_forward.4} parent=27 // pred_check_branch
        %178 = sbr.rel (%p176) target = $region32
      $region31: #{basic_block_forward.4} parent=27 // pred_region
        %p179 = scmp.lt.s32.totalorder %s12, 1
        %s180 = scalar_select %p179, %s12, 1
        %s181 = smul.addr %s180, 3
        %s182 = smul.addr %s181, 8
        %s183 = scalar_lea.vmem %s0, %s182
      $region32: #{basic_block_forward.4} parent=27 // pred_fallthru
        _
    $region28: #{basic_block_forward.4} parent=5 // pred_fallthru
      _
    %p184 = scmp.le.s32.totalorder 1, %s12
    %p185 = scmp.lt.s32.totalorder %s12, 3
    %p186 = pnand %p184, %p185
    %p187 = pneg %p186
    // Predicated region
    $region33: #{basic_block_forward.4} parent=5 // pred_check
      _
    $region34: #{basic_block_forward.4} parent=5 // pred_check_branch
      %189 = sbr.rel (%p186) target = $region36
    $region35: #{basic_block_forward.4} parent=5 // pred_region
      %s190 = ssub.s32 %s12, 1
      %p191 = scmp.lt.s32.totalorder %s17, 1
      %s192 = scalar_select %p191, %s17, 1
      %s193 = smul.addr %s192, 3
      %s194 = smul.addr %s193, 8
      %s195 = scalar_lea.vmem %s0, %s194
      %p196 = pneg %p38
      %p197 = pneg %p35
      %p198 = pneg %p59
      %p199 = pneg %p56
      %p200 = pneg %p80
      %p201 = pneg %p77
      %p202 = pneg %p101
      %p203 = pneg %p98
      %p204 = pneg %p127
      %p205 = pneg %p124
      %p206 = scmp.lt.s32.totalorder %s17, 1
      %s207 = scalar_select %p206, %s17, 1
      %s208 = smul.addr %s207, 3
      %s209 = smul.addr %s208, 8
      %s210 = scalar_lea.vmem %s4, %s209
      %p211 = pneg %p148
      %p212 = pneg %p145
      %p213 = scmp.lt.s32.totalorder %s17, 1
      %s214 = scalar_select %p213, %s17, 1
      %s215 = smul.addr %s214, 3
      %s216 = smul.addr %s215, 8
      %s217 = scalar_lea.vmem %s0, %s216
      %p218 = scmp.lt.s32.totalorder %s17, 1
      %s219 = scalar_select %p218, %s17, 1
      %s220 = smul.addr %s219, 3
      %s221 = smul.addr %s220, 8
      %s222 = scalar_lea.vmem %s4, %s221
      %p223 = scmp.eq.s32.totalorder %s17, 0
      // Predicated region
      $region37: #{basic_block_forward.4} parent=35 // pred_check
        %p224 = pneg %p223
      $region38: #{basic_block_forward.4} parent=35 // pred_check_branch
        %226 = sbr.rel (%p224) target = $region40
      $region39: #{basic_block_forward.4} parent=35 // pred_region
        %vm227 = vcmask 15360
        %228 = vst.msk [vmem:[%s5] sm:$0xff] %vm227, 0.0
      $region40: #{basic_block_forward.4} parent=35 // pred_fallthru
        _
      %v229 = vld [vmem:[%s3] sm:$0x7]
      %v230 = vld [vmem:[%s217] sm:$0xff]
      %v231 = vld [vmem:[%s217 + $0x8] sm:$0xff]
      %v232 = vld [vmem:[%s217 + $0x10] sm:$0xff]
      %v233 = vld [vmem:[%s2] sm:$0xff]
      %235 = vset.pattern.permute.xlu0 0
      %236 = vperm.xlu0 %235, %v233
      %v237 = vpop.permute.xlu0 %236
      %v239 = vmul.f32 %v230, %v237
      %v240 = vmul.f32 %v231, %v237
      %v241 = vmul.f32 %v232, %v237
      %242 = vset.pattern.permute.xlu0 1
      %243 = vperm.xlu0 %242, %v233
      %v244 = vpop.permute.xlu0 %243
      %v246 = vadd.f32 %v239, %v244
      %v247 = vadd.f32 %v240, %v244
      %v248 = vadd.f32 %v241, %v244
      %v249 = vmax.f32 %v246, 0.0
      %v250 = vmax.f32 %v247, 0.0
      %v251 = vmax.f32 %v248, 0.0
      %v253 = vlaneseq
      %v254 = vshrl.u32 %v253, 7
      %v255 = vsub.s32 0, %v254
      %v256 = vrot.slane %v229, %v255
      %v257 = vlaneseq
      %v258 = vshrl.u32 %v257, 7
      %v259 = vsub.s32 1, %v258
      %v260 = vrot.slane %v229, %v259
      %v261 = vlaneseq
      %v262 = vshrl.u32 %v261, 7
      %v263 = vsub.s32 2, %v262
      %v264 = vrot.slane %v229, %v263
      %v268 = vmul.f32 %v256, %v249
      %v269 = vmul.f32 %v260, %v250
      %v270 = vmul.f32 %v264, %v251
      %272 = vrot.lane.b32.xlu0 %v270, 19
      %v273 = vpop.permute.xlu0 %272
      %277 = vrot.lane.b32.xlu0 %v268, 19
      %v278 = vpop.permute.xlu0 %277
      %279 = vrot.lane.b32.xlu0 %v269, 19
      %v280 = vpop.permute.xlu0 %279
      %vm281 = vcmask 154624
      %v282 = vsel %vm281, %v278, %v280
      %v283 = vsel %vm281, %v280, %v273
      %v287 = vsel %vm281, %v273, %v278
      %288 = vrot.lane.b32.xlu0 %v270, 18
      %v289 = vpop.permute.xlu0 %288
      %291 = vrot.lane.b32.xlu0 %v268, 18
      %v292 = vpop.permute.xlu0 %291
      %293 = vrot.lane.b32.xlu0 %v269, 18
      %v294 = vpop.permute.xlu0 %293
      %vm295 = vcmask 146432
      %v296 = vsel %vm295, %v292, %v294
      %v297 = vsel %vm295, %v294, %v289
      %v301 = vsel %vm295, %v289, %v292
      %302 = vrot.lane.b32.xlu0 %v270, 17
      %v303 = vpop.permute.xlu0 %302
      %305 = vrot.lane.b32.xlu0 %v268, 17
      %v306 = vpop.permute.xlu0 %305
      %307 = vrot.lane.b32.xlu0 %v269, 17
      %v308 = vpop.permute.xlu0 %307
      %vm309 = vcmask 138240
      %v310 = vsel %vm309, %v306, %v308
      %v311 = vsel %vm309, %v308, %v303
      %v315 = vsel %vm309, %v303, %v306
      %316 = vrot.lane.b32.xlu0 %v270, 1
      %v317 = vpop.permute.xlu0 %316
      %319 = vrot.lane.b32.xlu0 %v268, 1
      %v320 = vpop.permute.xlu0 %319
      %321 = vrot.lane.b32.xlu0 %v269, 1
      %v322 = vpop.permute.xlu0 %321
      %vm323 = vcmask 7168
      %v324 = vsel %vm323, %v320, %v322
      %v325 = vsel %vm323, %v322, %v317
      %v329 = vsel %vm323, %v317, %v320
      %330 = vrot.lane.b32.xlu0 %v268, 127
      %v331 = vpop.permute.xlu0 %330
      %332 = vrot.lane.b32.xlu0 %v269, 127
      %v333 = vpop.permute.xlu0 %332
      %334 = vrot.lane.b32.xlu0 %v270, 127
      %v335 = vpop.permute.xlu0 %334
      %vm336 = vcmask 1039360
      %v337 = vsel %vm336, %v331, %v333
      %v338 = vsel %vm336, %v333, %v335
      %v343 = vsel %vm336, %v335, %v331
      %344 = vrot.lane.b32.xlu0 %v268, 111
      %v345 = vpop.permute.xlu0 %344
      %346 = vrot.lane.b32.xlu0 %v269, 111
      %v347 = vpop.permute.xlu0 %346
      %348 = vrot.lane.b32.xlu0 %v270, 111
      %v349 = vpop.permute.xlu0 %348
      %vm350 = vcmask 908288
      %v351 = vsel %vm350, %v345, %v347
      %v352 = vsel %vm350, %v347, %v349
      %v357 = vsel %vm350, %v349, %v345
      %358 = vrot.lane.b32.xlu0 %v268, 110
      %v359 = vpop.permute.xlu0 %358
      %360 = vrot.lane.b32.xlu0 %v269, 110
      %v361 = vpop.permute.xlu0 %360
      %362 = vrot.lane.b32.xlu0 %v270, 110
      %v363 = vpop.permute.xlu0 %362
      %vm364 = vcmask 900096
      %v365 = vsel %vm364, %v359, %v361
      %v366 = vsel %vm364, %v361, %v363
      %v371 = vsel %vm364, %v363, %v359
      %372 = vrot.lane.b32.xlu0 %v268, 109
      %v373 = vpop.permute.xlu0 %372
      %374 = vrot.lane.b32.xlu0 %v269, 109
      %v375 = vpop.permute.xlu0 %374
      %376 = vrot.lane.b32.xlu0 %v270, 109
      %v377 = vpop.permute.xlu0 %376
      %vm378 = vcmask 891904
      %v379 = vsel %vm378, %v373, %v375
      %v380 = vsel %vm378, %v375, %v377
      %v385 = vsel %vm378, %v377, %v373
      %v386 = vld [vmem:[%s1] sm:$0xff]
      %vm387 = vcmask 588800
      %v389 = vsel %vm387, %v386, 0
      %391 = vmatprep.subr.mxu0 %v282
      %392 = vmatpush1.msra.mxu0 %v287
      %393 = vmatprep.subr.mxu0 %v296
      %394 = vmatpush1.msra.mxu0 %v301
      %395 = vmatprep.subr.mxu0 %v310
      %396 = vmatpush1.msra.mxu0 %v315
      %397 = vmatprep.subr.mxu0 %v324
      %398 = vmatpush1.msra.mxu0 %v329
      %399 = vmatprep.subr.mxu0 %v269
      %400 = vmatpush1.msra.mxu0 %v268
      %401 = vmatprep.subr.mxu0 %v338
      %402 = vmatpush1.msra.mxu0 %v337
      %403 = vmatprep.subr.mxu0 %v352
      %404 = vmatpush1.msra.mxu0 %v351
      %405 = vmatprep.subr.mxu0 %v366
      %406 = vmatpush1.msra.mxu0 %v365
      %407 = vmatprep.subr.mxu0 %v380
      %408 = vmatpush1.msra.mxu0 %v379
      %409 = vmatprep.subr.mxu0 0.0
      %410 = vmatpush1.msra.mxu0 0.0
      %411 = vmatprep.subr.mxu0 0.0
      %412 = vmatpush1.msra.mxu0 0.0
      %413 = vmatprep.subr.mxu0 0.0
      %414 = vmatpush1.msra.mxu0 0.0
      %415 = vmatprep.subr.mxu0 0.0
      %416 = vmatpush1.msra.mxu0 0.0
      %417 = vmatprep.subr.mxu0 0.0
      %418 = vmatpush1.msra.mxu0 0.0
      %419 = vmatprep.subr.mxu0 0.0
      %420 = vmatpush1.msra.mxu0 0.0
      %421 = vmatprep.subr.mxu0 0.0
      %422 = vmatpush1.msra.mxu0 0.0
      %423 = vmatprep.subr.mxu0 0.0
      %424 = vmatpush1.msra.mxu0 0.0
      %425 = vmatprep.subr.mxu0 0.0
      %426 = vmatpush1.msra.mxu0 0.0
      %427 = vmatprep.subr.mxu0 0.0
      %428 = vmatpush1.msra.mxu0 0.0
      %429 = vmatprep.subr.mxu0 0.0
      %430 = vmatpush1.msra.mxu0 0.0
      %431 = vmatprep.subr.mxu0 0.0
      %432 = vmatpush1.msra.mxu0 0.0
      %433 = vmatprep.subr.mxu0 0.0
      %434 = vmatpush1.msra.mxu0 0.0
      %435 = vmatprep.subr.mxu0 0.0
      %436 = vmatpush1.msra.mxu0 0.0
      %437 = vmatprep.subr.mxu0 0.0
      %438 = vmatpush1.msra.mxu0 0.0
      %439 = vmatprep.subr.mxu0 0.0
      %440 = vmatpush1.msra.mxu0 0.0
      %441 = vmatprep.subr.mxu0 0.0
      %442 = vmatpush1.msra.mxu0 0.0
      %443 = vmatprep.subr.mxu0 0.0
      %444 = vmatpush1.msra.mxu0 0.0
      %445 = vmatprep.subr.mxu0 0.0
      %446 = vmatpush1.msra.mxu0 0.0
      %447 = vmatprep.subr.mxu0 0.0
      %448 = vmatpush1.msra.mxu0 0.0
      %449 = vmatprep.subr.mxu0 0.0
      %450 = vmatpush1.msra.mxu0 0.0
      %451 = vmatprep.subr.mxu0 0.0
      %452 = vmatpush1.msra.mxu0 0.0
      %453 = vmatprep.subr.mxu0 0.0
      %454 = vmatpush1.msra.mxu0 0.0
      %455 = vmatprep.mubr.f32.mxu0 0.0
      %456 = vmatmul.mubr.f32.gmra.mrb[0].mxu0 %v389
      %v457 = vpop.f32.mrb[0].mxu0
      %v458 = vadd.f32 0.0, %v457
      %v459 = vpop.f32.mrb[0].mxu0
      %v460 = vadd.f32 0.0, %v459
      %461 = vdwg.mxu0
      %462 = vmatprep.subr.mxu0 0.0
      %463 = vmatpush1.msra.mxu0 %v283
      %464 = vmatprep.subr.mxu0 0.0
      %465 = vmatpush1.msra.mxu0 %v297
      %466 = vmatprep.subr.mxu0 0.0
      %467 = vmatpush1.msra.mxu0 %v311
      %468 = vmatprep.subr.mxu0 0.0
      %469 = vmatpush1.msra.mxu0 %v325
      %470 = vmatprep.subr.mxu0 0.0
      %471 = vmatpush1.msra.mxu0 %v270
      %472 = vmatprep.subr.mxu0 0.0
      %473 = vmatpush1.msra.mxu0 %v343
      %474 = vmatprep.subr.mxu0 0.0
      %475 = vmatpush1.msra.mxu0 %v357
      %476 = vmatprep.subr.mxu0 0.0
      %477 = vmatpush1.msra.mxu0 %v371
      %478 = vmatprep.subr.mxu0 0.0
      %479 = vmatpush1.msra.mxu0 %v385
      %480 = vmatprep.subr.mxu0 0.0
      %481 = vmatpush1.msra.mxu0 0.0
      %482 = vmatprep.subr.mxu0 0.0
      %483 = vmatpush1.msra.mxu0 0.0
      %484 = vmatprep.subr.mxu0 0.0
      %485 = vmatpush1.msra.mxu0 0.0
      %486 = vmatprep.subr.mxu0 0.0
      %487 = vmatpush1.msra.mxu0 0.0
      %488 = vmatprep.subr.mxu0 0.0
      %489 = vmatpush1.msra.mxu0 0.0
      %490 = vmatprep.subr.mxu0 0.0
      %491 = vmatpush1.msra.mxu0 0.0
      %492 = vmatprep.subr.mxu0 0.0
      %493 = vmatpush1.msra.mxu0 0.0
      %494 = vmatprep.subr.mxu0 0.0
      %495 = vmatpush1.msra.mxu0 0.0
      %496 = vmatprep.subr.mxu0 0.0
      %497 = vmatpush1.msra.mxu0 0.0
      %498 = vmatprep.subr.mxu0 0.0
      %499 = vmatpush1.msra.mxu0 0.0
      %500 = vmatprep.subr.mxu0 0.0
      %501 = vmatpush1.msra.mxu0 0.0
      %502 = vmatprep.subr.mxu0 0.0
      %503 = vmatpush1.msra.mxu0 0.0
      %504 = vmatprep.subr.mxu0 0.0
      %505 = vmatpush1.msra.mxu0 0.0
      %506 = vmatprep.subr.mxu0 0.0
      %507 = vmatpush1.msra.mxu0 0.0
      %508 = vmatprep.subr.mxu0 0.0
      %509 = vmatpush1.msra.mxu0 0.0
      %510 = vmatprep.subr.mxu0 0.0
      %511 = vmatpush1.msra.mxu0 0.0
      %512 = vmatprep.subr.mxu0 0.0
      %513 = vmatpush1.msra.mxu0 0.0
      %514 = vmatprep.subr.mxu0 0.0
      %515 = vmatpush1.msra.mxu0 0.0
      %516 = vmatprep.subr.mxu0 0.0
      %517 = vmatpush1.msra.mxu0 0.0
      %518 = vmatprep.subr.mxu0 0.0
      %519 = vmatpush1.msra.mxu0 0.0
      %520 = vmatprep.subr.mxu0 0.0
      %521 = vmatpush1.msra.mxu0 0.0
      %522 = vmatprep.subr.mxu0 0.0
      %523 = vmatpush1.msra.mxu0 0.0
      %524 = vmatprep.subr.mxu0 0.0
      %525 = vmatpush1.msra.mxu0 0.0
      %526 = vmatprep.mubr.f32.mxu0 0.0
      %527 = vmatmul.mubr.f32.gmra.mrb[0].mxu0 %v389
      %v528 = vpop.f32.mrb[0].mxu0
      %v529 = vadd.f32 0.0, %v528
      %v530 = vpop.f32.mrb[0].mxu0
      %531 = vdwg.mxu0
      %532 = vst [vmem:[%s222] sm:$0xff] %v458
      %533 = vst [vmem:[%s222 + $0x8] sm:$0xff] %v460
      %534 = vst [vmem:[%s222 + $0x10] sm:$0xff] %v529
      %v535 = vmul.f32 %v458, %v256
      %v536 = vmul.f32 %v460, %v260
      %v537 = vmul.f32 %v529, %v264
      %v538 = vadd.f32 %v535, %v536
      %v539 = vadd.f32 %v538, %v537
      %540 = vadd.xlane.f32.xlu0 %v539
      %v541 = vpop.xlane.xlu0 %540
      %v542 = vmul.f32 %v535, %v458
      %v543 = vmul.f32 %v536, %v460
      %v544 = vmul.f32 %v537, %v529
      %v545 = vadd.f32 %v542, %v543
      %v546 = vadd.f32 %v545, %v544
      %547 = vadd.xlane.f32.xlu0 %v546
      %v548 = vpop.xlane.xlu0 %547
      %v549 = vld [vmem:[%s5] sm:$0xff]
      %v550 = vsel %vm323, %v541, %v548
      %v551 = vadd.f32 %v549, %v550
      %vm552 = vcmask 15360
      %553 = vst.msk [vmem:[%s5] sm:$0xff] %vm552, %v551
      %p554 = scmp.lt.s32.totalorder %s17, 1
      %s555 = scalar_select %p554, %s17, 1
      %s556 = smul.addr %s555, 3
      %s557 = smul.addr %s556, 8
      %s558 = scalar_lea.vmem %s4, %s557
      // Predicated region
      $region41: #{basic_block_forward.4} parent=35 // pred_check
        %p559 = pneg %p124
      $region42: #{basic_block_forward.4} parent=35 // pred_check_branch
        %561 = sbr.rel (%p559) target = $region44
      $region43: #{basic_block_forward.4} parent=35 // pred_region
        _
      $region44: #{basic_block_forward.4} parent=35 // pred_fallthru
        _
      // Predicated region
      $region45: #{basic_block_forward.4} parent=35 // pred_check
        %p562 = pneg %p145
      $region46: #{basic_block_forward.4} parent=35 // pred_check_branch
        %564 = sbr.rel (%p562) target = $region48
      $region47: #{basic_block_forward.4} parent=35 // pred_region
        _
      $region48: #{basic_block_forward.4} parent=35 // pred_fallthru
        _
      // Predicated region
      $region49: #{basic_block_forward.4} parent=35 // pred_check
        %p565 = pneg %p145
      $region50: #{basic_block_forward.4} parent=35 // pred_check_branch
        %567 = sbr.rel (%p565) target = $region52
      $region51: #{basic_block_forward.4} parent=35 // pred_region
        _
      $region52: #{basic_block_forward.4} parent=35 // pred_fallthru
        _
    $region36: #{basic_block_forward.4} parent=5 // pred_fallthru
      _
    %p568 = scmp.le.s32.totalorder 2, %s12
    // Predicated region
    $region53: #{basic_block_forward.4} parent=5 // pred_check
      %p569 = pneg %p568
    $region54: #{basic_block_forward.4} parent=5 // pred_check_branch
      %571 = sbr.rel (%p569) target = $region56
    $region55: #{basic_block_forward.4} parent=5 // pred_region
      %s572 = ssub.s32 %s12, 2
      // Predicated region
      $region57: #{basic_block_forward.4} parent=55 // pred_check
        %p573 = pneg %p130
      $region58: #{basic_block_forward.4} parent=55 // pred_check_branch
        %575 = sbr.rel (%p573) target = $region60
      $region59: #{basic_block_forward.4} parent=55 // pred_region
        %p576 = scmp.lt.s32.totalorder %s18, 1
        %s577 = scalar_select %p576, %s18, 1
        %s578 = smul.addr %s577, 3
        %s579 = smul.addr %s578, 8
        %s580 = scalar_lea.vmem %s4, %s579
      $region60: #{basic_block_forward.4} parent=55 // pred_fallthru
        _
    $region56: #{basic_block_forward.4} parent=5 // pred_fallthru
      _
  $region6: #{basic_block_forward.4} parent=0 // loop_footer
    %s16 = sadd.s32 1, %s12
  $region7: #{basic_block_forward.4} parent=0 // loop_footer_branch
    %11 = sbr.rel target = $region3
  $region8: #{basic_block_forward.4} parent=0 // loop_exit
    _

// kernel: basic_block_forward.3
$region0: #{basic_block_forward.3}
  #allocation0 [shape = 'u32[]', space=smem, size = 0x4, offset = 0x4, fixed_abs, tag = 'smem constant byte address 0x4 - core index']
  #allocation1 [shape = 'u32[144,128]{1,0:T(1,128)}', space=vmem, size = 0x12000, scoped, tag = 'internal scratch']
  %s0 = inlined_call_operand.vmem [shape: f32[2,8,384], index: 0, kind: input, shape index: {}]
  %s1 = inlined_call_operand.vmem [shape: f32[8,72], index: 1, kind: input, shape index: {}]
  %s2 = inlined_call_operand.vmem [shape: f32[1,384], index: 2, kind: input, shape index: {}]
  %s3 = inlined_call_operand.vmem [shape: f32[2,8,384], index: 3, kind: output, shape index: {0}]
  %s4 = inlined_call_operand.vmem [shape: f32[8,2], index: 4, kind: output, shape index: {1}]
  %5 = xla_tuple %s3, %s4
  %s6 = sld [smem:[#allocation0]]
  $region57: #{basic_block_forward.3} parent=0
    _
  %s8 = ssub.s32 1, %s6
  %s9 = scalar_select 0, %s8, %s6
  loop: start=0, step=1, limit=4
  $region2: #{basic_block_forward.3} parent=0 // loop_pre_header
    _
  $region3: #{basic_block_forward.3} parent=0 // loop_header
    %s11 = sphi 0, %s15
    %p12 = scmp.ge.s32.totalorder %s11, 4
    %s21 = sphi 0, %s23
    %s24 = sphi 0, %s21
    %s25 = sphi 0, %s24
    %s41 = sphi 0, %s25
    %s45 = sphi 0, %s45
    %s47 = sphi 0, %s45
    %s48 = sphi 0, %s47
    %s62 = sphi 0, %s48
    %s66 = sphi 0, %s66
    %s68 = sphi 0, %s66
    %s69 = sphi 0, %s68
    %s83 = sphi 0, %s69
    %s89 = sphi 0, %s91
    %s92 = sphi 0, %s89
    %s93 = sphi 0, %s92
    %s109 = sphi 0, %s93
    %s113 = sphi 0, %s113
    %s115 = sphi 0, %s113
    %s116 = sphi 0, %s115
    %s130 = sphi 0, %s116
  $region4: #{basic_block_forward.3} parent=0 // loop_header_branch
    %14 = sbr.rel (%p12) target = $region8
  $region5: #{basic_block_forward.3} parent=0 // loop_body
    %s16 = ssub.s32 %s11, 1
    %s17 = ssub.s32 %s11, 2
    %s18 = sadd.s32 %s11, 1
    %s19 = ssub.s32 %s11, %s18
    %p20 = scmp.eq.s32.totalorder %s19, 0
    %s22 = sadd.s32 %s21, 1
    %s23 = scalar_select %p20, %s21, %s22
    %p26 = pneg %p20
    %p27 = scmp.eq.s32.totalorder %s11, 1
    %p28 = por %p26, %p27
    %p29 = scmp.ne.s32.totalorder %s21, %s24
    %p30 = scmp.eq.s32.totalorder %s11, 0
    %p31 = por %p29, %p30
    %p32 = scmp.ne.s32.totalorder %s21, %s24
    %p33 = scmp.eq.s32.totalorder %s16, 1
    %p34 = por %p32, %p33
    %p35 = scmp.ne.s32.totalorder %s24, %s25
    %p36 = scmp.eq.s32.totalorder %s16, 0
    %p37 = por %p35, %p36
    %p38 = scmp.ne.s32.totalorder %s24, %s25
    %p39 = scmp.eq.s32.totalorder %s17, 1
    %p40 = por %p38, %p39
    %p42 = scmp.ne.s32.totalorder %s25, %s41
    %p43 = scmp.eq.s32.totalorder %s17, 0
    %p44 = por %p42, %p43
    %s46 = sadd.s32 %s45, 1
    %p49 = scmp.eq.s32.totalorder %s11, 1
    %p50 = scmp.ne.s32.totalorder %s45, %s47
    %p51 = scmp.eq.s32.totalorder %s11, 0
    %p52 = por %p50, %p51
    %p53 = scmp.ne.s32.totalorder %s45, %s47
    %p54 = scmp.eq.s32.totalorder %s16, 1
    %p55 = por %p53, %p54
    %p56 = scmp.ne.s32.totalorder %s47, %s48
    %p57 = scmp.eq.s32.totalorder %s16, 0
    %p58 = por %p56, %p57
    %p59 = scmp.ne.s32.totalorder %s47, %s48
    %p60 = scmp.eq.s32.totalorder %s17, 1
    %p61 = por %p59, %p60
    %p63 = scmp.ne.s32.totalorder %s48, %s62
    %p64 = scmp.eq.s32.totalorder %s17, 0
    %p65 = por %p63, %p64
    %s67 = sadd.s32 %s66, 1
    %p70 = scmp.eq.s32.totalorder %s11, 1
    %p71 = scmp.ne.s32.totalorder %s66, %s68
    %p72 = scmp.eq.s32.totalorder %s11, 0
    %p73 = por %p71, %p72
    %p74 = scmp.ne.s32.totalorder %s66, %s68
    %p75 = scmp.eq.s32.totalorder %s16, 1
    %p76 = por %p74, %p75
    %p77 = scmp.ne.s32.totalorder %s68, %s69
    %p78 = scmp.eq.s32.totalorder %s16, 0
    %p79 = por %p77, %p78
    %p80 = scmp.ne.s32.totalorder %s68, %s69
    %p81 = scmp.eq.s32.totalorder %s17, 1
    %p82 = por %p80, %p81
    %p84 = scmp.ne.s32.totalorder %s69, %s83
    %p85 = scmp.eq.s32.totalorder %s17, 0
    %p86 = por %p84, %p85
    %s87 = ssub.s32 %s11, %s18
    %p88 = scmp.eq.s32.totalorder %s87, 0
    %s90 = sadd.s32 %s89, 1
    %s91 = scalar_select %p88, %s89, %s90
    %p94 = pneg %p88
    %p95 = scmp.eq.s32.totalorder %s11, 1
    %p96 = por %p94, %p95
    %p97 = scmp.ne.s32.totalorder %s89, %s92
    %p98 = scmp.eq.s32.totalorder %s11, 0
    %p99 = por %p97, %p98
    %p100 = scmp.ne.s32.totalorder %s89, %s92
    %p101 = scmp.eq.s32.totalorder %s16, 1
    %p102 = por %p100, %p101
    %p103 = scmp.ne.s32.totalorder %s92, %s93
    %p104 = scmp.eq.s32.totalorder %s16, 0
    %p105 = por %p103, %p104
    %p106 = scmp.ne.s32.totalorder %s92, %s93
    %p107 = scmp.eq.s32.totalorder %s17, 1
    %p108 = por %p106, %p107
    %p110 = scmp.ne.s32.totalorder %s93, %s109
    %p111 = scmp.eq.s32.totalorder %s17, 0
    %p112 = por %p110, %p111
    %s114 = sadd.s32 %s113, 1
    %p117 = scmp.eq.s32.totalorder %s11, 1
    %p118 = scmp.ne.s32.totalorder %s113, %s115
    %p119 = scmp.eq.s32.totalorder %s11, 0
    %p120 = por %p118, %p119
    %p121 = scmp.ne.s32.totalorder %s113, %s115
    %p122 = scmp.eq.s32.totalorder %s16, 1
    %p123 = por %p121, %p122
    %p124 = scmp.ne.s32.totalorder %s115, %s116
    %p125 = scmp.eq.s32.totalorder %s16, 0
    %p126 = por %p124, %p125
    %p127 = scmp.ne.s32.totalorder %s115, %s116
    %p128 = scmp.eq.s32.totalorder %s17, 1
    %p129 = por %p127, %p128
    %p131 = scmp.ne.s32.totalorder %s116, %s130
    %p132 = scmp.eq.s32.totalorder %s17, 0
    %p133 = por %p131, %p132
    %p134 = scmp.le.s32.totalorder 1, %s11
    %p135 = scmp.lt.s32.totalorder %s11, 3
    %p136 = pnand %p134, %p135
    %p137 = pneg %p136
    // Predicated region
    $region9: #{basic_block_forward.3} parent=5 // pred_check
      _
    $region10: #{basic_block_forward.3} parent=5 // pred_check_branch
      %139 = sbr.rel (%p136) target = $region12
    $region11: #{basic_block_forward.3} parent=5 // pred_region
      %s140 = ssub.s32 %s11, 1
      // Predicated region
      $region13: #{basic_block_forward.3} parent=11 // pred_check
        %p141 = pneg %p58
      $region14: #{basic_block_forward.3} parent=11 // pred_check_branch
        %143 = sbr.rel (%p141) target = $region16
      $region15: #{basic_block_forward.3} parent=11 // pred_region
        _
      $region16: #{basic_block_forward.3} parent=11 // pred_fallthru
        _
      // Predicated region
      $region17: #{basic_block_forward.3} parent=11 // pred_check
        %p144 = pneg %p79
      $region18: #{basic_block_forward.3} parent=11 // pred_check_branch
        %146 = sbr.rel (%p144) target = $region20
      $region19: #{basic_block_forward.3} parent=11 // pred_region
        _
      $region20: #{basic_block_forward.3} parent=11 // pred_fallthru
        _
    $region12: #{basic_block_forward.3} parent=5 // pred_fallthru
      _
    %p147 = scmp.lt.s32.totalorder %s11, 2
    // Predicated region
    $region21: #{basic_block_forward.3} parent=5 // pred_check
      %p148 = pneg %p147
    $region22: #{basic_block_forward.3} parent=5 // pred_check_branch
      %150 = sbr.rel (%p148) target = $region24
    $region23: #{basic_block_forward.3} parent=5 // pred_region
      // Predicated region
      $region25: #{basic_block_forward.3} parent=23 // pred_check
        %p151 = pneg %p31
      $region26: #{basic_block_forward.3} parent=23 // pred_check_branch
        %153 = sbr.rel (%p151) target = $region28
      $region27: #{basic_block_forward.3} parent=23 // pred_region
        %p154 = scmp.lt.s32.totalorder %s11, 1
        %s155 = scalar_select %p154, %s11, 1
        %s156 = smul.addr %s155, 3
        %s157 = smul.addr %s156, 8
        %s158 = scalar_lea.vmem %s0, %s157
      $region28: #{basic_block_forward.3} parent=23 // pred_fallthru
        _
    $region24: #{basic_block_forward.3} parent=5 // pred_fallthru
      _
    %p159 = scmp.le.s32.totalorder 1, %s11
    %p160 = scmp.lt.s32.totalorder %s11, 3
    %p161 = pnand %p159, %p160
    %p162 = pneg %p161
    // Predicated region
    $region29: #{basic_block_forward.3} parent=5 // pred_check
      _
    $region30: #{basic_block_forward.3} parent=5 // pred_check_branch
      %164 = sbr.rel (%p161) target = $region32
    $region31: #{basic_block_forward.3} parent=5 // pred_region
      %s165 = ssub.s32 %s11, 1
      %p166 = scmp.lt.s32.totalorder %s16, 1
      %s167 = scalar_select %p166, %s16, 1
      %s168 = smul.addr %s167, 3
      %s169 = smul.addr %s168, 8
      %s170 = scalar_lea.vmem %s0, %s169
      %p171 = pneg %p37
      %p172 = pneg %p34
      %p173 = pneg %p58
      %p174 = pneg %p55
      %p175 = pneg %p79
      %p176 = pneg %p76
      %p177 = pneg %p105
      %p178 = pneg %p102
      %p179 = scmp.lt.s32.totalorder %s16, 1
      %s180 = scalar_select %p179, %s16, 1
      %s181 = smul.addr %s180, 3
      %s182 = smul.addr %s181, 8
      %s183 = scalar_lea.vmem %s3, %s182
      %p184 = pneg %p126
      %p185 = pneg %p123
      %p186 = scmp.lt.s32.totalorder %s16, 1
      %s187 = scalar_select %p186, %s16, 1
      %s188 = smul.addr %s187, 3
      %s189 = smul.addr %s188, 8
      %s190 = scalar_lea.vmem %s0, %s189
      %p191 = scmp.lt.s32.totalorder %s16, 1
      %s192 = scalar_select %p191, %s16, 1
      %s193 = smul.addr %s192, 3
      %s194 = smul.addr %s193, 8
      %s195 = scalar_lea.vmem %s3, %s194
      %p196 = scmp.eq.s32.totalorder %s16, 0
      // Predicated region
      $region33: #{basic_block_forward.3} parent=31 // pred_check
        %p197 = pneg %p196
      $region34: #{basic_block_forward.3} parent=31 // pred_check_branch
        %199 = sbr.rel (%p197) target = $region36
      $region35: #{basic_block_forward.3} parent=31 // pred_region
        %vm200 = vcmask 15360
        %201 = vst.msk [vmem:[%s4] sm:$0xff] %vm200, 0.0
      $region36: #{basic_block_forward.3} parent=31 // pred_fallthru
        _
      %v202 = vld [vmem:[%s2] sm:$0x7]
      %v203 = vld [vmem:[%s190] sm:$0xff]
      %v204 = vld [vmem:[%s190 + $0x8] sm:$0xff]
      %v205 = vld [vmem:[%s190 + $0x10] sm:$0xff]
      %207 = vrot.lane.b32.xlu0 %v205, 19
      %v208 = vpop.permute.xlu0 %207
      %212 = vrot.lane.b32.xlu0 %v203, 19
      %v213 = vpop.permute.xlu0 %212
      %214 = vrot.lane.b32.xlu0 %v204, 19
      %v215 = vpop.permute.xlu0 %214
      %vm216 = vcmask 154624
      %v217 = vsel %vm216, %v213, %v215
      %v218 = vsel %vm216, %v215, %v208
      %v222 = vsel %vm216, %v208, %v213
      %223 = vrot.lane.b32.xlu0 %v205, 18
      %v224 = vpop.permute.xlu0 %223
      %226 = vrot.lane.b32.xlu0 %v203, 18
      %v227 = vpop.permute.xlu0 %226
      %228 = vrot.lane.b32.xlu0 %v204, 18
      %v229 = vpop.permute.xlu0 %228
      %vm230 = vcmask 146432
      %v231 = vsel %vm230, %v227, %v229
      %v232 = vsel %vm230, %v229, %v224
      %v236 = vsel %vm230, %v224, %v227
      %237 = vrot.lane.b32.xlu0 %v205, 17
      %v238 = vpop.permute.xlu0 %237
      %240 = vrot.lane.b32.xlu0 %v203, 17
      %v241 = vpop.permute.xlu0 %240
      %242 = vrot.lane.b32.xlu0 %v204, 17
      %v243 = vpop.permute.xlu0 %242
      %vm244 = vcmask 138240
      %v245 = vsel %vm244, %v241, %v243
      %v246 = vsel %vm244, %v243, %v238
      %v250 = vsel %vm244, %v238, %v241
      %251 = vrot.lane.b32.xlu0 %v205, 1
      %v252 = vpop.permute.xlu0 %251
      %254 = vrot.lane.b32.xlu0 %v203, 1
      %v255 = vpop.permute.xlu0 %254
      %256 = vrot.lane.b32.xlu0 %v204, 1
      %v257 = vpop.permute.xlu0 %256
      %vm258 = vcmask 7168
      %v259 = vsel %vm258, %v255, %v257
      %v260 = vsel %vm258, %v257, %v252
      %v264 = vsel %vm258, %v252, %v255
      %265 = vrot.lane.b32.xlu0 %v203, 127
      %v266 = vpop.permute.xlu0 %265
      %267 = vrot.lane.b32.xlu0 %v204, 127
      %v268 = vpop.permute.xlu0 %267
      %269 = vrot.lane.b32.xlu0 %v205, 127
      %v270 = vpop.permute.xlu0 %269
      %vm271 = vcmask 1039360
      %v272 = vsel %vm271, %v266, %v268
      %v273 = vsel %vm271, %v268, %v270
      %v278 = vsel %vm271, %v270, %v266
      %279 = vrot.lane.b32.xlu0 %v203, 111
      %v280 = vpop.permute.xlu0 %279
      %281 = vrot.lane.b32.xlu0 %v204, 111
      %v282 = vpop.permute.xlu0 %281
      %283 = vrot.lane.b32.xlu0 %v205, 111
      %v284 = vpop.permute.xlu0 %283
      %vm285 = vcmask 908288
      %v286 = vsel %vm285, %v280, %v282
      %v287 = vsel %vm285, %v282, %v284
      %v292 = vsel %vm285, %v284, %v280
      %293 = vrot.lane.b32.xlu0 %v203, 110
      %v294 = vpop.permute.xlu0 %293
      %295 = vrot.lane.b32.xlu0 %v204, 110
      %v296 = vpop.permute.xlu0 %295
      %297 = vrot.lane.b32.xlu0 %v205, 110
      %v298 = vpop.permute.xlu0 %297
      %vm299 = vcmask 900096
      %v300 = vsel %vm299, %v294, %v296
      %v301 = vsel %vm299, %v296, %v298
      %v306 = vsel %vm299, %v298, %v294
      %307 = vrot.lane.b32.xlu0 %v203, 109
      %v308 = vpop.permute.xlu0 %307
      %309 = vrot.lane.b32.xlu0 %v204, 109
      %v310 = vpop.permute.xlu0 %309
      %311 = vrot.lane.b32.xlu0 %v205, 109
      %v312 = vpop.permute.xlu0 %311
      %vm313 = vcmask 891904
      %v314 = vsel %vm313, %v308, %v310
      %v315 = vsel %vm313, %v310, %v312
      %v320 = vsel %vm313, %v312, %v308
      %v321 = vld [vmem:[%s1] sm:$0xff]
      %vm322 = vcmask 588800
      %v324 = vsel %vm322, %v321, 0
      %326 = vmatprep.subr.mxu0 %v217
      %327 = vmatpush1.msra.mxu0 %v222
      %328 = vmatprep.subr.mxu0 %v231
      %329 = vmatpush1.msra.mxu0 %v236
      %330 = vmatprep.subr.mxu0 %v245
      %331 = vmatpush1.msra.mxu0 %v250
      %332 = vmatprep.subr.mxu0 %v259
      %333 = vmatpush1.msra.mxu0 %v264
      %334 = vmatprep.subr.mxu0 %v204
      %335 = vmatpush1.msra.mxu0 %v203
      %336 = vmatprep.subr.mxu0 %v273
      %337 = vmatpush1.msra.mxu0 %v272
      %338 = vmatprep.subr.mxu0 %v287
      %339 = vmatpush1.msra.mxu0 %v286
      %340 = vmatprep.subr.mxu0 %v301
      %341 = vmatpush1.msra.mxu0 %v300
      %342 = vmatprep.subr.mxu0 %v315
      %343 = vmatpush1.msra.mxu0 %v314
      %344 = vmatprep.subr.mxu0 0.0
      %345 = vmatpush1.msra.mxu0 0.0
      %346 = vmatprep.subr.mxu0 0.0
      %347 = vmatpush1.msra.mxu0 0.0
      %348 = vmatprep.subr.mxu0 0.0
      %349 = vmatpush1.msra.mxu0 0.0
      %350 = vmatprep.subr.mxu0 0.0
      %351 = vmatpush1.msra.mxu0 0.0
      %352 = vmatprep.subr.mxu0 0.0
      %353 = vmatpush1.msra.mxu0 0.0
      %354 = vmatprep.subr.mxu0 0.0
      %355 = vmatpush1.msra.mxu0 0.0
      %356 = vmatprep.subr.mxu0 0.0
      %357 = vmatpush1.msra.mxu0 0.0
      %358 = vmatprep.subr.mxu0 0.0
      %359 = vmatpush1.msra.mxu0 0.0
      %360 = vmatprep.subr.mxu0 0.0
      %361 = vmatpush1.msra.mxu0 0.0
      %362 = vmatprep.subr.mxu0 0.0
      %363 = vmatpush1.msra.mxu0 0.0
      %364 = vmatprep.subr.mxu0 0.0
      %365 = vmatpush1.msra.mxu0 0.0
      %366 = vmatprep.subr.mxu0 0.0
      %367 = vmatpush1.msra.mxu0 0.0
      %368 = vmatprep.subr.mxu0 0.0
      %369 = vmatpush1.msra.mxu0 0.0
      %370 = vmatprep.subr.mxu0 0.0
      %371 = vmatpush1.msra.mxu0 0.0
      %372 = vmatprep.subr.mxu0 0.0
      %373 = vmatpush1.msra.mxu0 0.0
      %374 = vmatprep.subr.mxu0 0.0
      %375 = vmatpush1.msra.mxu0 0.0
      %376 = vmatprep.subr.mxu0 0.0
      %377 = vmatpush1.msra.mxu0 0.0
      %378 = vmatprep.subr.mxu0 0.0
      %379 = vmatpush1.msra.mxu0 0.0
      %380 = vmatprep.subr.mxu0 0.0
      %381 = vmatpush1.msra.mxu0 0.0
      %382 = vmatprep.subr.mxu0 0.0
      %383 = vmatpush1.msra.mxu0 0.0
      %384 = vmatprep.subr.mxu0 0.0
      %385 = vmatpush1.msra.mxu0 0.0
      %386 = vmatprep.subr.mxu0 0.0
      %387 = vmatpush1.msra.mxu0 0.0
      %388 = vmatprep.subr.mxu0 0.0
      %389 = vmatpush1.msra.mxu0 0.0
      %390 = vmatprep.mubr.f32.mxu0 0.0
      %391 = vmatmul.mubr.f32.gmra.mrb[0].mxu0 %v324
      %v392 = vpop.f32.mrb[0].mxu0
      %v393 = vadd.f32 0.0, %v392
      %v394 = vpop.f32.mrb[0].mxu0
      %v395 = vadd.f32 0.0, %v394
      %396 = vdwg.mxu0
      %397 = vmatprep.subr.mxu0 0.0
      %398 = vmatpush1.msra.mxu0 %v218
      %399 = vmatprep.subr.mxu0 0.0
      %400 = vmatpush1.msra.mxu0 %v232
      %401 = vmatprep.subr.mxu0 0.0
      %402 = vmatpush1.msra.mxu0 %v246
      %403 = vmatprep.subr.mxu0 0.0
      %404 = vmatpush1.msra.mxu0 %v260
      %405 = vmatprep.subr.mxu0 0.0
      %406 = vmatpush1.msra.mxu0 %v205
      %407 = vmatprep.subr.mxu0 0.0
      %408 = vmatpush1.msra.mxu0 %v278
      %409 = vmatprep.subr.mxu0 0.0
      %410 = vmatpush1.msra.mxu0 %v292
      %411 = vmatprep.subr.mxu0 0.0
      %412 = vmatpush1.msra.mxu0 %v306
      %413 = vmatprep.subr.mxu0 0.0
      %414 = vmatpush1.msra.mxu0 %v320
      %415 = vmatprep.subr.mxu0 0.0
      %416 = vmatpush1.msra.mxu0 0.0
      %417 = vmatprep.subr.mxu0 0.0
      %418 = vmatpush1.msra.mxu0 0.0
      %419 = vmatprep.subr.mxu0 0.0
      %420 = vmatpush1.msra.mxu0 0.0
      %421 = vmatprep.subr.mxu0 0.0
      %422 = vmatpush1.msra.mxu0 0.0
      %423 = vmatprep.subr.mxu0 0.0
      %424 = vmatpush1.msra.mxu0 0.0
      %425 = vmatprep.subr.mxu0 0.0
      %426 = vmatpush1.msra.mxu0 0.0
      %427 = vmatprep.subr.mxu0 0.0
      %428 = vmatpush1.msra.mxu0 0.0
      %429 = vmatprep.subr.mxu0 0.0
      %430 = vmatpush1.msra.mxu0 0.0
      %431 = vmatprep.subr.mxu0 0.0
      %432 = vmatpush1.msra.mxu0 0.0
      %433 = vmatprep.subr.mxu0 0.0
      %434 = vmatpush1.msra.mxu0 0.0
      %435 = vmatprep.subr.mxu0 0.0
      %436 = vmatpush1.msra.mxu0 0.0
      %437 = vmatprep.subr.mxu0 0.0
      %438 = vmatpush1.msra.mxu0 0.0
      %439 = vmatprep.subr.mxu0 0.0
      %440 = vmatpush1.msra.mxu0 0.0
      %441 = vmatprep.subr.mxu0 0.0
      %442 = vmatpush1.msra.mxu0 0.0
      %443 = vmatprep.subr.mxu0 0.0
      %444 = vmatpush1.msra.mxu0 0.0
      %445 = vmatprep.subr.mxu0 0.0
      %446 = vmatpush1.msra.mxu0 0.0
      %447 = vmatprep.subr.mxu0 0.0
      %448 = vmatpush1.msra.mxu0 0.0
      %449 = vmatprep.subr.mxu0 0.0
      %450 = vmatpush1.msra.mxu0 0.0
      %451 = vmatprep.subr.mxu0 0.0
      %452 = vmatpush1.msra.mxu0 0.0
      %453 = vmatprep.subr.mxu0 0.0
      %454 = vmatpush1.msra.mxu0 0.0
      %455 = vmatprep.subr.mxu0 0.0
      %456 = vmatpush1.msra.mxu0 0.0
      %457 = vmatprep.subr.mxu0 0.0
      %458 = vmatpush1.msra.mxu0 0.0
      %459 = vmatprep.subr.mxu0 0.0
      %460 = vmatpush1.msra.mxu0 0.0
      %461 = vmatprep.mubr.f32.mxu0 0.0
      %462 = vmatmul.mubr.f32.gmra.mrb[0].mxu0 %v324
      %v463 = vpop.f32.mrb[0].mxu0
      %v464 = vadd.f32 0.0, %v463
      %v465 = vpop.f32.mrb[0].mxu0
      %466 = vdwg.mxu0
      %467 = vst [vmem:[%s195] sm:$0xff] %v393
      %468 = vst [vmem:[%s195 + $0x8] sm:$0xff] %v395
      %469 = vst [vmem:[%s195 + $0x10] sm:$0xff] %v464
      %v471 = vlaneseq
      %v472 = vshrl.u32 %v471, 7
      %v473 = vsub.s32 0, %v472
      %v474 = vrot.slane %v202, %v473
      %v475 = vlaneseq
      %v476 = vshrl.u32 %v475, 7
      %v477 = vsub.s32 1, %v476
      %v478 = vrot.slane %v202, %v477
      %v479 = vlaneseq
      %v480 = vshrl.u32 %v479, 7
      %v481 = vsub.s32 2, %v480
      %v482 = vrot.slane %v202, %v481
      %v486 = vmul.f32 %v393, %v474
      %v487 = vmul.f32 %v395, %v478
      %v488 = vmul.f32 %v464, %v482
      %v489 = vadd.f32 %v486, %v487
      %v490 = vadd.f32 %v489, %v488
      %491 = vadd.xlane.f32.xlu0 %v490
      %v492 = vpop.xlane.xlu0 %491
      %v493 = vmul.f32 %v486, %v393
      %v494 = vmul.f32 %v487, %v395
      %v495 = vmul.f32 %v488, %v464
      %v496 = vadd.f32 %v493, %v494
      %v497 = vadd.f32 %v496, %v495
      %498 = vadd.xlane.f32.xlu0 %v497
      %v499 = vpop.xlane.xlu0 %498
      %v500 = vld [vmem:[%s4] sm:$0xff]
      %v501 = vsel %vm258, %v492, %v499
      %v502 = vadd.f32 %v500, %v501
      %vm503 = vcmask 15360
      %504 = vst.msk [vmem:[%s4] sm:$0xff] %vm503, %v502
      %p505 = scmp.lt.s32.totalorder %s16, 1
      %s506 = scalar_select %p505, %s16, 1
      %s507 = smul.addr %s506, 3
      %s508 = smul.addr %s507, 8
      %s509 = scalar_lea.vmem %s3, %s508
      // Predicated region
      $region37: #{basic_block_forward.3} parent=31 // pred_check
        %p510 = pneg %p102
      $region38: #{basic_block_forward.3} parent=31 // pred_check_branch
        %512 = sbr.rel (%p510) target = $region40
      $region39: #{basic_block_forward.3} parent=31 // pred_region
        _
      $region40: #{basic_block_forward.3} parent=31 // pred_fallthru
        _
      // Predicated region
      $region41: #{basic_block_forward.3} parent=31 // pred_check
        %p513 = pneg %p123
      $region42: #{basic_block_forward.3} parent=31 // pred_check_branch
        %515 = sbr.rel (%p513) target = $region44
      $region43: #{basic_block_forward.3} parent=31 // pred_region
        _
      $region44: #{basic_block_forward.3} parent=31 // pred_fallthru
        _
      // Predicated region
      $region45: #{basic_block_forward.3} parent=31 // pred_check
        %p516 = pneg %p123
      $region46: #{basic_block_forward.3} parent=31 // pred_check_branch
        %518 = sbr.rel (%p516) target = $region48
      $region47: #{basic_block_forward.3} parent=31 // pred_region
        _
      $region48: #{basic_block_forward.3} parent=31 // pred_fallthru
        _
    $region32: #{basic_block_forward.3} parent=5 // pred_fallthru
      _
    %p519 = scmp.le.s32.totalorder 2, %s11
    // Predicated region
    $region49: #{basic_block_forward.3} parent=5 // pred_check
      %p520 = pneg %p519
    $region50: #{basic_block_forward.3} parent=5 // pred_check_branch
      %522 = sbr.rel (%p520) target = $region52
    $region51: #{basic_block_forward.3} parent=5 // pred_region
      %s523 = ssub.s32 %s11, 2
      // Predicated region
      $region53: #{basic_block_forward.3} parent=51 // pred_check
        %p524 = pneg %p108
      $region54: #{basic_block_forward.3} parent=51 // pred_check_branch
        %526 = sbr.rel (%p524) target = $region56
      $region55: #{basic_block_forward.3} parent=51 // pred_region
        %p527 = scmp.lt.s32.totalorder %s17, 1
        %s528 = scalar_select %p527, %s17, 1
        %s529 = smul.addr %s528, 3
        %s530 = smul.addr %s529, 8
        %s531 = scalar_lea.vmem %s3, %s530
      $region56: #{basic_block_forward.3} parent=51 // pred_fallthru
        _
    $region52: #{basic_block_forward.3} parent=5 // pred_fallthru
      _
  $region6: #{basic_block_forward.3} parent=0 // loop_footer
    %s15 = sadd.s32 1, %s11
  $region7: #{basic_block_forward.3} parent=0 // loop_footer_branch
    %10 = sbr.rel target = $region3
  $region8: #{basic_block_forward.3} parent=0 // loop_exit
    _

</llo_original>
